<compile_context>
chip_gen: v7x
topology: tpu7x:2x2x1
jax: 0.10.0
libtpu: 0.0.40
codegen_flags: <defaults>
</compile_context>

<pallas_src>
import jax
import jax.numpy as jnp
from jax.experimental import pallas as pl
from jax.experimental.pallas import tpu as pltpu


def _round_up(x, m):
    return (x + m - 1) // m * m


def _mlp_packed_kernel(x_ref, w1_ref, b1_ref, w2_ref, b2_ref, w3_ref, b3_ref,
                       out_ref):
    """One batch tile: 3-layer MLP; outputs packed into a single lane slab."""
    x = x_ref[...].astype(jnp.float32)

    h1 = jnp.dot(x, w1_ref[...], preferred_element_type=jnp.float32) + b1_ref[...]
    x1 = h1 * jax.nn.sigmoid(h1)            # SiLU; exp/recip go to the EUP

    h2 = jnp.dot(x1, w2_ref[...], preferred_element_type=jnp.float32) + b2_ref[...]
    x2 = h2 * jax.nn.sigmoid(h2)

    x3 = jnp.dot(x2, w3_ref[...], preferred_element_type=jnp.float32) + b3_ref[...]

    # Pack (x1 | x2 | x3) along the lane axis -> one dense output store/DMA per
    # tile instead of three narrow masked ones (widths 20 / 5 / 1).  The lane
    # shuffles go to the XLU, which is idle in this DMA-bound kernel.
    out_ref[...] = jnp.concatenate([x1, x2, x3], axis=-1).astype(out_ref.dtype)


def pixel_dem_encoder(x, params, *, tile_b=2048, out_dtype=None):
    """x: (B, TRF).  params: dict with w1,b1,w2,b2,w3,b3 (weights already (in,out)).

    tile_b: batch tile size.  2048 is a good default on v5e/v6e/v7x (the
    footprint is ~6 MiB of pipeline buffers, well under every generation's
    VMEM).  out_dtype lets callers request bf16 activations to halve the
    writeback bytes; the in-kernel math stays f32.
    """
    B, F = x.shape
    w1, b1 = params["w1"], params["b1"]
    w2, b2 = params["w2"], params["b2"]
    w3, b3 = params["w3"], params["b3"]
    d1, d2, d3 = w1.shape[1], w2.shape[1], w3.shape[1]
    d_out = d1 + d2 + d3
    out_dtype = x.dtype if out_dtype is None else out_dtype

    # Big tiles amortize per-grid-step overhead; clamp for small inputs and
    # pad ragged batch sizes instead of asserting divisibility.
    tile_b = max(8, min(tile_b, _round_up(B, 256)))
    B_pad = _round_up(B, tile_b)
    if B_pad != B:
        x = jnp.pad(x, ((0, B_pad - B), (0, 0)))
    grid = (B_pad // tile_b,)

    # VMEM budget: (x tile + packed output tile), lane-padded to 128 lanes,
    # double-buffered, plus slack for the resident weights.  Clamped to stay
    # safe on v7x (64 MiB physical) while lifting v5e's 16 MiB default.
    block_bytes = tile_b * 128 * 4
    vmem_limit = int(min(max(6 * block_bytes + (2 << 20), 16 << 20), 48 << 20))

    # Weights/biases are tiny: keep them resident in VMEM for the whole kernel
    # instead of six per-step pipelined block streams.
    vmem_resident = pl.BlockSpec(memory_space=pltpu.MemorySpace.VMEM)

    packed = pl.pallas_call(
        _mlp_packed_kernel,
        out_shape=jax.ShapeDtypeStruct((B_pad, d_out), out_dtype),
        grid_spec=pltpu.PrefetchScalarGridSpec(
            num_scalar_prefetch=0,
            grid=grid,
            in_specs=[
                pl.BlockSpec((tile_b, F), lambda i: (i, 0)),   # x tile
                vmem_resident, vmem_resident,                  # w1, b1
                vmem_resident, vmem_resident,                  # w2, b2
                vmem_resident, vmem_resident,                  # w3, b3
            ],
            out_specs=pl.BlockSpec((tile_b, d_out), lambda i: (i, 0)),
        ),
        compiler_params=pltpu.CompilerParams(
            dimension_semantics=("parallel",),   # v7x: shard batch over 2 TCs
            vmem_limit_bytes=vmem_limit,
        ),
    )(x, w1, b1, w2, b2, w3, b3)

    packed = packed[:B]
    x1 = packed[:, :d1]
    x2 = packed[:, d1:d1 + d2]
    x3 = packed[:, d1 + d2:]
    return x1, x2, x3


def init_params(key, trf_size=81):
    """Deterministic synthetic params; weights stored (in, out) (transposed vs nn.Linear)."""
    d0, d1, d2, d3 = trf_size, trf_size // 4, trf_size // 16, 1
    keys = jax.random.split(key, 6)

    def lin(kw, kb, fan_in, fan_out):
        bound = 1.0 / jnp.sqrt(fan_in)
        w = jax.random.uniform(kw, (fan_in, fan_out), jnp.float32, -bound, bound)
        b = jax.random.uniform(kb, (1, fan_out), jnp.float32, -bound, bound)
        return w, b

    w1, b1 = lin(keys[0], keys[1], d0, d1)
    w2, b2 = lin(keys[2], keys[3], d1, d2)
    w3, b3 = lin(keys[4], keys[5], d2, d3)
    return dict(w1=w1, b1=b1, w2=w2, b2=b2, w3=w3, b3=b3)


def reference(x, p):
    h1 = x @ p["w1"] + p["b1"]
    x1 = h1 * jax.nn.sigmoid(h1)
    h2 = x1 @ p["w2"] + p["b2"]
    x2 = h2 * jax.nn.sigmoid(h2)
    x3 = x2 @ p["w3"] + p["b3"]
    return x1, x2, x3


if __name__ == "__main__":
    TRF = 81
    B = 256  # number of "pixels" processed; small but tile-friendly

    key = jax.random.PRNGKey(0)
    kx, kp = jax.random.split(key)
    x = jax.random.normal(kx, (B, TRF), jnp.float32)
    params = init_params(kp, TRF)

    x1, x2, x3 = pixel_dem_encoder(x, params)
    jax.block_until_ready((x1, x2, x3))

    r1, r2, r3 = reference(x, params)
    assert x1.shape == (B, TRF // 4) and x2.shape == (B, TRF // 16) and x3.shape == (B, 1)
    assert jnp.allclose(x1, r1, atol=1e-5, rtol=1e-5)
    assert jnp.allclose(x2, r2, atol=1e-5, rtol=1e-5)
    assert jnp.allclose(x3, r3, atol=1e-5, rtol=1e-5)

    print("KERNEL_OK")
</pallas_src>

<mosaic_0001>
module attributes {stable_mosaic.version = 11 : i64} {
  func.func @_mlp_packed_kernel(%arg0: i32, %arg1: memref<256x81xf32, #tpu.memory_space<vmem>>, %arg2: memref<81x20xf32, #tpu.memory_space<vmem>>, %arg3: memref<1x20xf32, #tpu.memory_space<vmem>>, %arg4: memref<20x5xf32, #tpu.memory_space<vmem>>, %arg5: memref<1x5xf32, #tpu.memory_space<vmem>>, %arg6: memref<5x1xf32, #tpu.memory_space<vmem>>, %arg7: memref<1x1xf32, #tpu.memory_space<vmem>>, %arg8: memref<256x26xf32, #tpu.memory_space<vmem>>) attributes {dimension_semantics = [#tpu.dimension_semantics<parallel>], iteration_bounds = array<i64: 1>, scalar_prefetch = 0 : i64, scratch_operands = 0 : i64, tpu.core_type = #tpu.core_type<tc>, window_params = [{transform_indices = @transform_0, window_bounds = array<i64: 256, 81>}, {pipeline_mode = #tpu.pipeline_mode<synchronous>, transform_indices = @transform_1, window_bounds = array<i64: 81, 20>}, {pipeline_mode = #tpu.pipeline_mode<synchronous>, transform_indices = @transform_2, window_bounds = array<i64: 1, 20>}, {pipeline_mode = #tpu.pipeline_mode<synchronous>, transform_indices = @transform_3, window_bounds = array<i64: 20, 5>}, {pipeline_mode = #tpu.pipeline_mode<synchronous>, transform_indices = @transform_4, window_bounds = array<i64: 1, 5>}, {pipeline_mode = #tpu.pipeline_mode<synchronous>, transform_indices = @transform_5, window_bounds = array<i64: 5, 1>}, {pipeline_mode = #tpu.pipeline_mode<synchronous>, transform_indices = @transform_6, window_bounds = array<i64: 1, 1>}, {transform_indices = @transform_7, window_bounds = array<i64: 256, 26>}]} {
    %c0 = arith.constant 0 : index
    %c0_0 = arith.constant 0 : index
    %0 = vector.load %arg1[%c0, %c0_0] : memref<256x81xf32, #tpu.memory_space<vmem>>, vector<256x81xf32>
    %c0_1 = arith.constant 0 : index
    %c0_2 = arith.constant 0 : index
    %1 = vector.load %arg2[%c0_1, %c0_2] : memref<81x20xf32, #tpu.memory_space<vmem>>, vector<81x20xf32>
    %cst = arith.constant dense<0.000000e+00> : vector<256x20xf32>
    %2 = tpu.matmul %0, %1, %cst {dimension_numbers = #tpu.dot_dimension_numbers<[1], [0], [0], [1], [0, 0, 1, 1], [], []>} : vector<256x81xf32>, vector<81x20xf32>, vector<256x20xf32> -> vector<256x20xf32>
    %c0_3 = arith.constant 0 : index
    %c0_4 = arith.constant 0 : index
    %3 = vector.load %arg3[%c0_3, %c0_4] : memref<1x20xf32, #tpu.memory_space<vmem>>, vector<1x20xf32>
    %4 = vector.broadcast %3 : vector<1x20xf32> to vector<256x20xf32>
    %5 = arith.addf %2, %4 : vector<256x20xf32>
    %6 = arith.negf %5 : vector<256x20xf32>
    %7 = math.exp %6 : vector<256x20xf32>
    %cst_5 = arith.constant 1.000000e+00 : f32
    %8 = vector.broadcast %cst_5 : f32 to vector<256x20xf32>
    %9 = arith.addf %8, %7 : vector<256x20xf32>
    %10 = arith.divf %8, %9 : vector<256x20xf32>
    %11 = arith.mulf %5, %10 : vector<256x20xf32>
    %c0_6 = arith.constant 0 : index
    %c0_7 = arith.constant 0 : index
    %12 = vector.load %arg4[%c0_6, %c0_7] : memref<20x5xf32, #tpu.memory_space<vmem>>, vector<20x5xf32>
    %cst_8 = arith.constant dense<0.000000e+00> : vector<256x5xf32>
    %13 = tpu.matmul %11, %12, %cst_8 {dimension_numbers = #tpu.dot_dimension_numbers<[1], [0], [0], [1], [0, 0, 1, 1], [], []>} : vector<256x20xf32>, vector<20x5xf32>, vector<256x5xf32> -> vector<256x5xf32>
    %c0_9 = arith.constant 0 : index
    %c0_10 = arith.constant 0 : index
    %14 = vector.load %arg5[%c0_9, %c0_10] : memref<1x5xf32, #tpu.memory_space<vmem>>, vector<1x5xf32>
    %15 = vector.broadcast %14 : vector<1x5xf32> to vector<256x5xf32>
    %16 = arith.addf %13, %15 : vector<256x5xf32>
    %17 = arith.negf %16 : vector<256x5xf32>
    %18 = math.exp %17 : vector<256x5xf32>
    %cst_11 = arith.constant 1.000000e+00 : f32
    %19 = vector.broadcast %cst_11 : f32 to vector<256x5xf32>
    %20 = arith.addf %19, %18 : vector<256x5xf32>
    %21 = arith.divf %19, %20 : vector<256x5xf32>
    %22 = arith.mulf %16, %21 : vector<256x5xf32>
    %c0_12 = arith.constant 0 : index
    %c0_13 = arith.constant 0 : index
    %23 = vector.load %arg6[%c0_12, %c0_13] : memref<5x1xf32, #tpu.memory_space<vmem>>, vector<5x1xf32>
    %cst_14 = arith.constant dense<0.000000e+00> : vector<256x1xf32>
    %24 = tpu.matmul %22, %23, %cst_14 {dimension_numbers = #tpu.dot_dimension_numbers<[1], [0], [0], [1], [0, 0, 1, 1], [], []>} : vector<256x5xf32>, vector<5x1xf32>, vector<256x1xf32> -> vector<256x1xf32>
    %c0_15 = arith.constant 0 : index
    %c0_16 = arith.constant 0 : index
    %25 = vector.load %arg7[%c0_15, %c0_16] : memref<1x1xf32, #tpu.memory_space<vmem>>, vector<1x1xf32>
    %26 = vector.broadcast %25 : vector<1x1xf32> to vector<256x1xf32>
    %27 = arith.addf %24, %26 : vector<256x1xf32>
    %28 = tpu.concatenate %11, %22, %27 in 1 : vector<256x20xf32>, vector<256x5xf32>, vector<256x1xf32> -> vector<256x26xf32>
    %c0_17 = arith.constant 0 : index
    %c0_18 = arith.constant 0 : index
    %29 = vector.load %arg8[%c0_17, %c0_18] : memref<256x26xf32, #tpu.memory_space<vmem>>, vector<256x26xf32>
    tpu.vector_store %arg8[%c0_17, %c0_18], %28 {strides = array<i32>} : memref<256x26xf32, #tpu.memory_space<vmem>>, vector<256x26xf32>,
    return
  }
  func.func @transform_0(%arg0: i32) -> (i32, i32) {
    %c0_i32 = arith.constant 0 : i32
    %c0_i32_0 = arith.constant 0 : i32
    return %arg0, %c0_i32 : i32, i32
  }
  func.func @transform_1(%arg0: i32) -> (i32, i32) {
    %c0_i32 = arith.constant 0 : i32
    %c0_i32_0 = arith.constant 0 : i32
    %c0_i32_1 = arith.constant 0 : i32
    return %c0_i32, %c0_i32_0 : i32, i32
  }
  func.func @transform_2(%arg0: i32) -> (i32, i32) {
    %c0_i32 = arith.constant 0 : i32
    %c0_i32_0 = arith.constant 0 : i32
    %c0_i32_1 = arith.constant 0 : i32
    return %c0_i32, %c0_i32_0 : i32, i32
  }
  func.func @transform_3(%arg0: i32) -> (i32, i32) {
    %c0_i32 = arith.constant 0 : i32
    %c0_i32_0 = arith.constant 0 : i32
    %c0_i32_1 = arith.constant 0 : i32
    return %c0_i32, %c0_i32_0 : i32, i32
  }
  func.func @transform_4(%arg0: i32) -> (i32, i32) {
    %c0_i32 = arith.constant 0 : i32
    %c0_i32_0 = arith.constant 0 : i32
    %c0_i32_1 = arith.constant 0 : i32
    return %c0_i32, %c0_i32_0 : i32, i32
  }
  func.func @transform_5(%arg0: i32) -> (i32, i32) {
    %c0_i32 = arith.constant 0 : i32
    %c0_i32_0 = arith.constant 0 : i32
    %c0_i32_1 = arith.constant 0 : i32
    return %c0_i32, %c0_i32_0 : i32, i32
  }
  func.func @transform_6(%arg0: i32) -> (i32, i32) {
    %c0_i32 = arith.constant 0 : i32
    %c0_i32_0 = arith.constant 0 : i32
    %c0_i32_1 = arith.constant 0 : i32
    return %c0_i32, %c0_i32_0 : i32, i32
  }
  func.func @transform_7(%arg0: i32) -> (i32, i32) {
    %c0_i32 = arith.constant 0 : i32
    %c0_i32_0 = arith.constant 0 : i32
    return %arg0, %c0_i32 : i32, i32
  }
}

</mosaic_0001>

<llo_original>
// kernel: tpu_custom_call.1
$region0: #{tpu_custom_call.1}
  #allocation0 [shape = 'u32[]', space=smem, size = 0x4, offset = 0x4, fixed_abs, tag = 'smem constant byte address 0x4 - core index']
  #allocation1 [shape = 'u32[144,128]{1,0:T(1,128)}', space=vmem, size = 0x12000, scoped, tag = 'internal scratch']
  #allocation2 [shape = 'f32[1,1]{1,0:T(1,128)S(1)}', space=vmem, size = 0x200, scoped, tag = 'scoped memory for tpu_custom_call.1']
  %s0 = inlined_call_operand.vmem [shape: f32[256,81], index: 0, kind: input, shape index: {}]
  %s1 = inlined_call_operand.vmem [shape: f32[81,20], index: 1, kind: input, shape index: {}]
  %s2 = inlined_call_operand.vmem [shape: f32[1,20], index: 2, kind: input, shape index: {}]
  %s3 = inlined_call_operand.vmem [shape: f32[20,5], index: 3, kind: input, shape index: {}]
  %s4 = inlined_call_operand.vmem [shape: f32[1,5], index: 4, kind: input, shape index: {}]
  %s5 = inlined_call_operand.vmem [shape: f32[5,1], index: 5, kind: input, shape index: {}]
  %s6 = inlined_call_operand.<no memory space> [shape: f32[1,1], index: 6, kind: input, shape index: {}]
  %s7 = inlined_call_operand.vmem [shape: f32[256,26], index: 7, kind: output, shape index: {}]
  %s8 = sld [smem:[#allocation0]]
  $region38: #{tpu_custom_call.1} parent=0
    _
  %s10 = ssub.s32 1, %s8
  %s11 = scalar_select 0, %s10, %s8
  %v12 = vstv %s6
  %13 = vst [vmem:[#allocation2] sm:$0x1] %v12
  // Predicated region
  $region2: #{tpu_custom_call.1} parent=0 // pred_check
    _
  $region3: #{tpu_custom_call.1} parent=0 // pred_check_branch
    %15 = sbr.rel (0) target = $region5
  $region4: #{tpu_custom_call.1} parent=0 // pred_region
    _
  $region5: #{tpu_custom_call.1} parent=0 // pred_fallthru
    _
  // Predicated region
  $region6: #{tpu_custom_call.1} parent=0 // pred_check
    _
  $region7: #{tpu_custom_call.1} parent=0 // pred_check_branch
    %17 = sbr.rel (0) target = $region9
  $region8: #{tpu_custom_call.1} parent=0 // pred_region
    _
  $region9: #{tpu_custom_call.1} parent=0 // pred_fallthru
    _
  // Predicated region
  $region10: #{tpu_custom_call.1} parent=0 // pred_check
    _
  $region11: #{tpu_custom_call.1} parent=0 // pred_check_branch
    %19 = sbr.rel (0) target = $region13
  $region12: #{tpu_custom_call.1} parent=0 // pred_region
    _
  $region13: #{tpu_custom_call.1} parent=0 // pred_fallthru
    _
  // Predicated region
  $region14: #{tpu_custom_call.1} parent=0 // pred_check
    _
  $region15: #{tpu_custom_call.1} parent=0 // pred_check_branch
    %21 = sbr.rel (0) target = $region17
  $region16: #{tpu_custom_call.1} parent=0 // pred_region
    _
  $region17: #{tpu_custom_call.1} parent=0 // pred_fallthru
    _
  // Predicated region
  $region18: #{tpu_custom_call.1} parent=0 // pred_check
    _
  $region19: #{tpu_custom_call.1} parent=0 // pred_check_branch
    %23 = sbr.rel (0) target = $region21
  $region20: #{tpu_custom_call.1} parent=0 // pred_region
    _
  $region21: #{tpu_custom_call.1} parent=0 // pred_fallthru
    _
  // Predicated region
  $region22: #{tpu_custom_call.1} parent=0 // pred_check
    _
  $region23: #{tpu_custom_call.1} parent=0 // pred_check_branch
    %25 = sbr.rel (0) target = $region25
  $region24: #{tpu_custom_call.1} parent=0 // pred_region
    _
  $region25: #{tpu_custom_call.1} parent=0 // pred_fallthru
    _
  // Predicated region
  $region26: #{tpu_custom_call.1} parent=0 // pred_check
    _
  $region27: #{tpu_custom_call.1} parent=0 // pred_check_branch
    %27 = sbr.rel (0) target = $region29
  $region28: #{tpu_custom_call.1} parent=0 // pred_region
    _
  $region29: #{tpu_custom_call.1} parent=0 // pred_fallthru
    _
  %v28 = vld [vmem:[%s0] sm:$0xff]
  %v29 = vld [vmem:[%s0 + $0x8] sm:$0xff]
  %v30 = vld [vmem:[%s0 + $0x10] sm:$0xff]
  %v31 = vld [vmem:[%s0 + $0x18] sm:$0xff]
  %v32 = vld [vmem:[%s0 + $0x20] sm:$0xff]
  %v33 = vld [vmem:[%s0 + $0x28] sm:$0xff]
  %v34 = vld [vmem:[%s0 + $0x30] sm:$0xff]
  %v35 = vld [vmem:[%s0 + $0x38] sm:$0xff]
  %v36 = vld [vmem:[%s0 + $0x40] sm:$0xff]
  %v37 = vld [vmem:[%s0 + $0x48] sm:$0xff]
  %v38 = vld [vmem:[%s0 + $0x50] sm:$0xff]
  %v39 = vld [vmem:[%s0 + $0x58] sm:$0xff]
  %v40 = vld [vmem:[%s0 + $0x60] sm:$0xff]
  %v41 = vld [vmem:[%s0 + $0x68] sm:$0xff]
  %v42 = vld [vmem:[%s0 + $0x70] sm:$0xff]
  %v43 = vld [vmem:[%s0 + $0x78] sm:$0xff]
  %v44 = vld [vmem:[%s0 + $0x80] sm:$0xff]
  %v45 = vld [vmem:[%s0 + $0x88] sm:$0xff]
  %v46 = vld [vmem:[%s0 + $0x90] sm:$0xff]
  %v47 = vld [vmem:[%s0 + $0x98] sm:$0xff]
  %v48 = vld [vmem:[%s0 + $0xa0] sm:$0xff]
  %v49 = vld [vmem:[%s0 + $0xa8] sm:$0xff]
  %v50 = vld [vmem:[%s0 + $0xb0] sm:$0xff]
  %v51 = vld [vmem:[%s0 + $0xb8] sm:$0xff]
  %v52 = vld [vmem:[%s0 + $0xc0] sm:$0xff]
  %v53 = vld [vmem:[%s0 + $0xc8] sm:$0xff]
  %v54 = vld [vmem:[%s0 + $0xd0] sm:$0xff]
  %v55 = vld [vmem:[%s0 + $0xd8] sm:$0xff]
  %v56 = vld [vmem:[%s0 + $0xe0] sm:$0xff]
  %v57 = vld [vmem:[%s0 + $0xe8] sm:$0xff]
  %v58 = vld [vmem:[%s0 + $0xf0] sm:$0xff]
  %v59 = vld [vmem:[%s0 + $0xf8] sm:$0xff]
  %v60 = vld [vmem:[%s1] sm:$0xff]
  %v61 = vld [vmem:[%s1 + $0x8] sm:$0xff]
  %v62 = vld [vmem:[%s1 + $0x10] sm:$0xff]
  %v63 = vld [vmem:[%s1 + $0x18] sm:$0xff]
  %v64 = vld [vmem:[%s1 + $0x20] sm:$0xff]
  %v65 = vld [vmem:[%s1 + $0x28] sm:$0xff]
  %v66 = vld [vmem:[%s1 + $0x30] sm:$0xff]
  %v67 = vld [vmem:[%s1 + $0x38] sm:$0xff]
  %v68 = vld [vmem:[%s1 + $0x40] sm:$0xff]
  %v69 = vld [vmem:[%s1 + $0x48] sm:$0xff]
  %v70 = vld [vmem:[%s1 + $0x50] sm:$0x1]
  %v71 = vld [vmem:[%s2] sm:$0x1]
  %v73 = vlaneseq
  %v74 = vshrl.u32 %v73, 7
  %v75 = vsub.s32 0, %v74
  %v76 = vrot.slane %v71, %v75
  %vm78 = vcmask 662528
  %v80 = vsel %vm78, %v28, 0
  %v83 = vsel %vm78, %v29, 0
  %v86 = vsel %vm78, %v30, 0
  %v89 = vsel %vm78, %v31, 0
  %v92 = vsel %vm78, %v32, 0
  %v95 = vsel %vm78, %v33, 0
  %v98 = vsel %vm78, %v34, 0
  %v101 = vsel %vm78, %v35, 0
  %v104 = vsel %vm78, %v36, 0
  %v107 = vsel %vm78, %v37, 0
  %v110 = vsel %vm78, %v38, 0
  %v113 = vsel %vm78, %v39, 0
  %v116 = vsel %vm78, %v40, 0
  %v119 = vsel %vm78, %v41, 0
  %v122 = vsel %vm78, %v42, 0
  %v125 = vsel %vm78, %v43, 0
  %v128 = vsel %vm78, %v44, 0
  %v131 = vsel %vm78, %v45, 0
  %v134 = vsel %vm78, %v46, 0
  %v137 = vsel %vm78, %v47, 0
  %v140 = vsel %vm78, %v48, 0
  %v143 = vsel %vm78, %v49, 0
  %v146 = vsel %vm78, %v50, 0
  %v149 = vsel %vm78, %v51, 0
  %v152 = vsel %vm78, %v52, 0
  %v155 = vsel %vm78, %v53, 0
  %v158 = vsel %vm78, %v54, 0
  %v161 = vsel %vm78, %v55, 0
  %v164 = vsel %vm78, %v56, 0
  %v167 = vsel %vm78, %v57, 0
  %v170 = vsel %vm78, %v58, 0
  %v173 = vsel %vm78, %v59, 0
  %vm175 = vcmask 1040384
  %v177 = vsel %vm175, %v70, 0
  %179 = vmatprep.subr.mxu0 0.0
  %180 = vmatpush1.msra.mxu0 %v60
  %181 = vmatprep.subr.mxu0 0.0
  %182 = vmatpush1.msra.mxu0 %v61
  %183 = vmatprep.subr.mxu0 0.0
  %184 = vmatpush1.msra.mxu0 %v62
  %185 = vmatprep.subr.mxu0 0.0
  %186 = vmatpush1.msra.mxu0 %v63
  %187 = vmatprep.subr.mxu0 0.0
  %188 = vmatpush1.msra.mxu0 %v64
  %189 = vmatprep.subr.mxu0 0.0
  %190 = vmatpush1.msra.mxu0 %v65
  %191 = vmatprep.subr.mxu0 0.0
  %192 = vmatpush1.msra.mxu0 %v66
  %193 = vmatprep.subr.mxu0 0.0
  %194 = vmatpush1.msra.mxu0 %v67
  %195 = vmatprep.subr.mxu0 0.0
  %196 = vmatpush1.msra.mxu0 %v68
  %197 = vmatprep.subr.mxu0 0.0
  %198 = vmatpush1.msra.mxu0 %v69
  %199 = vmatprep.subr.mxu0 0.0
  %200 = vmatpush1.msra.mxu0 %v177
  %201 = vmatprep.subr.mxu0 0.0
  %202 = vmatpush1.msra.mxu0 0.0
  %203 = vmatprep.subr.mxu0 0.0
  %204 = vmatpush1.msra.mxu0 0.0
  %205 = vmatprep.subr.mxu0 0.0
  %206 = vmatpush1.msra.mxu0 0.0
  %207 = vmatprep.subr.mxu0 0.0
  %208 = vmatpush1.msra.mxu0 0.0
  %209 = vmatprep.subr.mxu0 0.0
  %210 = vmatpush1.msra.mxu0 0.0
  %211 = vmatprep.subr.mxu0 0.0
  %212 = vmatpush1.msra.mxu0 0.0
  %213 = vmatprep.subr.mxu0 0.0
  %214 = vmatpush1.msra.mxu0 0.0
  %215 = vmatprep.subr.mxu0 0.0
  %216 = vmatpush1.msra.mxu0 0.0
  %217 = vmatprep.subr.mxu0 0.0
  %218 = vmatpush1.msra.mxu0 0.0
  %219 = vmatprep.subr.mxu0 0.0
  %220 = vmatpush1.msra.mxu0 0.0
  %221 = vmatprep.subr.mxu0 0.0
  %222 = vmatpush1.msra.mxu0 0.0
  %223 = vmatprep.subr.mxu0 0.0
  %224 = vmatpush1.msra.mxu0 0.0
  %225 = vmatprep.subr.mxu0 0.0
  %226 = vmatpush1.msra.mxu0 0.0
  %227 = vmatprep.subr.mxu0 0.0
  %228 = vmatpush1.msra.mxu0 0.0
  %229 = vmatprep.subr.mxu0 0.0
  %230 = vmatpush1.msra.mxu0 0.0
  %231 = vmatprep.subr.mxu0 0.0
  %232 = vmatpush1.msra.mxu0 0.0
  %233 = vmatprep.subr.mxu0 0.0
  %234 = vmatpush1.msra.mxu0 0.0
  %235 = vmatprep.subr.mxu0 0.0
  %236 = vmatpush1.msra.mxu0 0.0
  %237 = vmatprep.subr.mxu0 0.0
  %238 = vmatpush1.msra.mxu0 0.0
  %239 = vmatprep.subr.mxu0 0.0
  %240 = vmatpush1.msra.mxu0 0.0
  %241 = vmatprep.subr.mxu0 0.0
  %242 = vmatpush1.msra.mxu0 0.0
  %243 = vmatprep.mubr.f32.mxu0 0.0
  %244 = vmatmul.mubr.f32.gmra.mrb[0].mxu0 %v80
  %v245 = vpop.f32.mrb[0].mxu0
  %v246 = vadd.f32 %v76, %v245
  %v247 = vpop.f32.mrb[0].mxu0
  %248 = vmatprep.mubr.f32.mxu0 0.0
  %249 = vmatmul.mubr.f32.gmra.mrb[0].mxu0 %v83
  %v250 = vpop.f32.mrb[0].mxu0
  %v251 = vadd.f32 %v76, %v250
  %v252 = vpop.f32.mrb[0].mxu0
  %253 = vmatprep.mubr.f32.mxu0 0.0
  %254 = vmatmul.mubr.f32.gmra.mrb[0].mxu0 %v86
  %v255 = vpop.f32.mrb[0].mxu0
  %v256 = vadd.f32 %v76, %v255
  %v257 = vpop.f32.mrb[0].mxu0
  %258 = vmatprep.mubr.f32.mxu0 0.0
  %259 = vmatmul.mubr.f32.gmra.mrb[0].mxu0 %v89
  %v260 = vpop.f32.mrb[0].mxu0
  %v261 = vadd.f32 %v76, %v260
  %v262 = vpop.f32.mrb[0].mxu0
  %263 = vmatprep.mubr.f32.mxu0 0.0
  %264 = vmatmul.mubr.f32.gmra.mrb[0].mxu0 %v92
  %v265 = vpop.f32.mrb[0].mxu0
  %v266 = vadd.f32 %v76, %v265
  %v267 = vpop.f32.mrb[0].mxu0
  %268 = vmatprep.mubr.f32.mxu0 0.0
  %269 = vmatmul.mubr.f32.gmra.mrb[0].mxu0 %v95
  %v270 = vpop.f32.mrb[0].mxu0
  %v271 = vadd.f32 %v76, %v270
  %v272 = vpop.f32.mrb[0].mxu0
  %273 = vmatprep.mubr.f32.mxu0 0.0
  %274 = vmatmul.mubr.f32.gmra.mrb[0].mxu0 %v98
  %v275 = vpop.f32.mrb[0].mxu0
  %v276 = vadd.f32 %v76, %v275
  %v277 = vpop.f32.mrb[0].mxu0
  %278 = vmatprep.mubr.f32.mxu0 0.0
  %279 = vmatmul.mubr.f32.gmra.mrb[0].mxu0 %v101
  %v280 = vpop.f32.mrb[0].mxu0
  %v281 = vadd.f32 %v76, %v280
  %v282 = vpop.f32.mrb[0].mxu0
  %283 = vmatprep.mubr.f32.mxu0 0.0
  %284 = vmatmul.mubr.f32.gmra.mrb[0].mxu0 %v104
  %v285 = vpop.f32.mrb[0].mxu0
  %v286 = vadd.f32 %v76, %v285
  %v287 = vpop.f32.mrb[0].mxu0
  %288 = vmatprep.mubr.f32.mxu0 0.0
  %289 = vmatmul.mubr.f32.gmra.mrb[0].mxu0 %v107
  %v290 = vpop.f32.mrb[0].mxu0
  %v291 = vadd.f32 %v76, %v290
  %v292 = vpop.f32.mrb[0].mxu0
  %293 = vmatprep.mubr.f32.mxu0 0.0
  %294 = vmatmul.mubr.f32.gmra.mrb[0].mxu0 %v110
  %v295 = vpop.f32.mrb[0].mxu0
  %v296 = vadd.f32 %v76, %v295
  %v297 = vpop.f32.mrb[0].mxu0
  %298 = vmatprep.mubr.f32.mxu0 0.0
  %299 = vmatmul.mubr.f32.gmra.mrb[0].mxu0 %v113
  %v300 = vpop.f32.mrb[0].mxu0
  %v301 = vadd.f32 %v76, %v300
  %v302 = vpop.f32.mrb[0].mxu0
  %303 = vmatprep.mubr.f32.mxu0 0.0
  %304 = vmatmul.mubr.f32.gmra.mrb[0].mxu0 %v116
  %v305 = vpop.f32.mrb[0].mxu0
  %v306 = vadd.f32 %v76, %v305
  %v307 = vpop.f32.mrb[0].mxu0
  %308 = vmatprep.mubr.f32.mxu0 0.0
  %309 = vmatmul.mubr.f32.gmra.mrb[0].mxu0 %v119
  %v310 = vpop.f32.mrb[0].mxu0
  %v311 = vadd.f32 %v76, %v310
  %v312 = vpop.f32.mrb[0].mxu0
  %313 = vmatprep.mubr.f32.mxu0 0.0
  %314 = vmatmul.mubr.f32.gmra.mrb[0].mxu0 %v122
  %v315 = vpop.f32.mrb[0].mxu0
  %v316 = vadd.f32 %v76, %v315
  %v317 = vpop.f32.mrb[0].mxu0
  %318 = vmatprep.mubr.f32.mxu0 0.0
  %319 = vmatmul.mubr.f32.gmra.mrb[0].mxu0 %v125
  %v320 = vpop.f32.mrb[0].mxu0
  %v321 = vadd.f32 %v76, %v320
  %v322 = vpop.f32.mrb[0].mxu0
  %323 = vmatprep.mubr.f32.mxu0 0.0
  %324 = vmatmul.mubr.f32.gmra.mrb[0].mxu0 %v128
  %v325 = vpop.f32.mrb[0].mxu0
  %v326 = vadd.f32 %v76, %v325
  %v327 = vpop.f32.mrb[0].mxu0
  %328 = vmatprep.mubr.f32.mxu0 0.0
  %329 = vmatmul.mubr.f32.gmra.mrb[0].mxu0 %v131
  %v330 = vpop.f32.mrb[0].mxu0
  %v331 = vadd.f32 %v76, %v330
  %v332 = vpop.f32.mrb[0].mxu0
  %333 = vmatprep.mubr.f32.mxu0 0.0
  %334 = vmatmul.mubr.f32.gmra.mrb[0].mxu0 %v134
  %v335 = vpop.f32.mrb[0].mxu0
  %v336 = vadd.f32 %v76, %v335
  %v337 = vpop.f32.mrb[0].mxu0
  %338 = vmatprep.mubr.f32.mxu0 0.0
  %339 = vmatmul.mubr.f32.gmra.mrb[0].mxu0 %v137
  %v340 = vpop.f32.mrb[0].mxu0
  %v341 = vadd.f32 %v76, %v340
  %v342 = vpop.f32.mrb[0].mxu0
  %343 = vmatprep.mubr.f32.mxu0 0.0
  %344 = vmatmul.mubr.f32.gmra.mrb[0].mxu0 %v140
  %v345 = vpop.f32.mrb[0].mxu0
  %v346 = vadd.f32 %v76, %v345
  %v347 = vpop.f32.mrb[0].mxu0
  %348 = vmatprep.mubr.f32.mxu0 0.0
  %349 = vmatmul.mubr.f32.gmra.mrb[0].mxu0 %v143
  %v350 = vpop.f32.mrb[0].mxu0
  %v351 = vadd.f32 %v76, %v350
  %v352 = vpop.f32.mrb[0].mxu0
  %353 = vmatprep.mubr.f32.mxu0 0.0
  %354 = vmatmul.mubr.f32.gmra.mrb[0].mxu0 %v146
  %v355 = vpop.f32.mrb[0].mxu0
  %v356 = vadd.f32 %v76, %v355
  %v357 = vpop.f32.mrb[0].mxu0
  %358 = vmatprep.mubr.f32.mxu0 0.0
  %359 = vmatmul.mubr.f32.gmra.mrb[0].mxu0 %v149
  %v360 = vpop.f32.mrb[0].mxu0
  %v361 = vadd.f32 %v76, %v360
  %v362 = vpop.f32.mrb[0].mxu0
  %363 = vmatprep.mubr.f32.mxu0 0.0
  %364 = vmatmul.mubr.f32.gmra.mrb[0].mxu0 %v152
  %v365 = vpop.f32.mrb[0].mxu0
  %v366 = vadd.f32 %v76, %v365
  %v367 = vpop.f32.mrb[0].mxu0
  %368 = vmatprep.mubr.f32.mxu0 0.0
  %369 = vmatmul.mubr.f32.gmra.mrb[0].mxu0 %v155
  %v370 = vpop.f32.mrb[0].mxu0
  %v371 = vadd.f32 %v76, %v370
  %v372 = vpop.f32.mrb[0].mxu0
  %373 = vmatprep.mubr.f32.mxu0 0.0
  %374 = vmatmul.mubr.f32.gmra.mrb[0].mxu0 %v158
  %v375 = vpop.f32.mrb[0].mxu0
  %v376 = vadd.f32 %v76, %v375
  %v377 = vpop.f32.mrb[0].mxu0
  %378 = vmatprep.mubr.f32.mxu0 0.0
  %379 = vmatmul.mubr.f32.gmra.mrb[0].mxu0 %v161
  %v380 = vpop.f32.mrb[0].mxu0
  %v381 = vadd.f32 %v76, %v380
  %v382 = vpop.f32.mrb[0].mxu0
  %383 = vmatprep.mubr.f32.mxu0 0.0
  %384 = vmatmul.mubr.f32.gmra.mrb[0].mxu0 %v164
  %v385 = vpop.f32.mrb[0].mxu0
  %v386 = vadd.f32 %v76, %v385
  %v387 = vpop.f32.mrb[0].mxu0
  %388 = vmatprep.mubr.f32.mxu0 0.0
  %389 = vmatmul.mubr.f32.gmra.mrb[0].mxu0 %v167
  %v390 = vpop.f32.mrb[0].mxu0
  %v391 = vadd.f32 %v76, %v390
  %v392 = vpop.f32.mrb[0].mxu0
  %393 = vmatprep.mubr.f32.mxu0 0.0
  %394 = vmatmul.mubr.f32.gmra.mrb[0].mxu0 %v170
  %v395 = vpop.f32.mrb[0].mxu0
  %v396 = vadd.f32 %v76, %v395
  %v397 = vpop.f32.mrb[0].mxu0
  %398 = vmatprep.mubr.f32.mxu0 0.0
  %399 = vmatmul.mubr.f32.gmra.mrb[0].mxu0 %v173
  %v400 = vpop.f32.mrb[0].mxu0
  %v401 = vadd.f32 %v76, %v400
  %v402 = vpop.f32.mrb[0].mxu0
  %403 = vdwg.mxu0
  %v404 = vxor.u32 %v246, 2147483648
  %v405 = vxor.u32 %v251, 2147483648
  %v406 = vxor.u32 %v256, 2147483648
  %v407 = vxor.u32 %v261, 2147483648
  %v408 = vxor.u32 %v266, 2147483648
  %v409 = vxor.u32 %v271, 2147483648
  %v410 = vxor.u32 %v276, 2147483648
  %v411 = vxor.u32 %v281, 2147483648
  %v412 = vxor.u32 %v286, 2147483648
  %v413 = vxor.u32 %v291, 2147483648
  %v414 = vxor.u32 %v296, 2147483648
  %v415 = vxor.u32 %v301, 2147483648
  %v416 = vxor.u32 %v306, 2147483648
  %v417 = vxor.u32 %v311, 2147483648
  %v418 = vxor.u32 %v316, 2147483648
  %v419 = vxor.u32 %v321, 2147483648
  %v420 = vxor.u32 %v326, 2147483648
  %v421 = vxor.u32 %v331, 2147483648
  %v422 = vxor.u32 %v336, 2147483648
  %v423 = vxor.u32 %v341, 2147483648
  %v424 = vxor.u32 %v346, 2147483648
  %v425 = vxor.u32 %v351, 2147483648
  %v426 = vxor.u32 %v356, 2147483648
  %v427 = vxor.u32 %v361, 2147483648
  %v428 = vxor.u32 %v366, 2147483648
  %v429 = vxor.u32 %v371, 2147483648
  %v430 = vxor.u32 %v376, 2147483648
  %v431 = vxor.u32 %v381, 2147483648
  %v432 = vxor.u32 %v386, 2147483648
  %v433 = vxor.u32 %v391, 2147483648
  %v434 = vxor.u32 %v396, 2147483648
  %v435 = vxor.u32 %v401, 2147483648
  %v436 = vmul.f32 %v404, 1.442695
  %v437 = vpow.pop %v436
  %v438 = vmul.f32 %v405, 1.442695
  %v439 = vpow.pop %v438
  %v440 = vmul.f32 %v406, 1.442695
  %v441 = vpow.pop %v440
  %v442 = vmul.f32 %v407, 1.442695
  %v443 = vpow.pop %v442
  %v444 = vmul.f32 %v408, 1.442695
  %v445 = vpow.pop %v444
  %v446 = vmul.f32 %v409, 1.442695
  %v447 = vpow.pop %v446
  %v448 = vmul.f32 %v410, 1.442695
  %v449 = vpow.pop %v448
  %v450 = vmul.f32 %v411, 1.442695
  %v451 = vpow.pop %v450
  %v452 = vmul.f32 %v412, 1.442695
  %v453 = vpow.pop %v452
  %v454 = vmul.f32 %v413, 1.442695
  %v455 = vpow.pop %v454
  %v456 = vmul.f32 %v414, 1.442695
  %v457 = vpow.pop %v456
  %v458 = vmul.f32 %v415, 1.442695
  %v459 = vpow.pop %v458
  %v460 = vmul.f32 %v416, 1.442695
  %v461 = vpow.pop %v460
  %v462 = vmul.f32 %v417, 1.442695
  %v463 = vpow.pop %v462
  %v464 = vmul.f32 %v418, 1.442695
  %v465 = vpow.pop %v464
  %v466 = vmul.f32 %v419, 1.442695
  %v467 = vpow.pop %v466
  %v468 = vmul.f32 %v420, 1.442695
  %v469 = vpow.pop %v468
  %v470 = vmul.f32 %v421, 1.442695
  %v471 = vpow.pop %v470
  %v472 = vmul.f32 %v422, 1.442695
  %v473 = vpow.pop %v472
  %v474 = vmul.f32 %v423, 1.442695
  %v475 = vpow.pop %v474
  %v476 = vmul.f32 %v424, 1.442695
  %v477 = vpow.pop %v476
  %v478 = vmul.f32 %v425, 1.442695
  %v479 = vpow.pop %v478
  %v480 = vmul.f32 %v426, 1.442695
  %v481 = vpow.pop %v480
  %v482 = vmul.f32 %v427, 1.442695
  %v483 = vpow.pop %v482
  %v484 = vmul.f32 %v428, 1.442695
  %v485 = vpow.pop %v484
  %v486 = vmul.f32 %v429, 1.442695
  %v487 = vpow.pop %v486
  %v488 = vmul.f32 %v430, 1.442695
  %v489 = vpow.pop %v488
  %v490 = vmul.f32 %v431, 1.442695
  %v491 = vpow.pop %v490
  %v492 = vmul.f32 %v432, 1.442695
  %v493 = vpow.pop %v492
  %v494 = vmul.f32 %v433, 1.442695
  %v495 = vpow.pop %v494
  %v496 = vmul.f32 %v434, 1.442695
  %v497 = vpow.pop %v496
  %v498 = vmul.f32 %v435, 1.442695
  %v499 = vpow.pop %v498
  %v500 = vadd.f32 %v437, 1.0
  %v501 = vadd.f32 %v439, 1.0
  %v502 = vadd.f32 %v441, 1.0
  %v503 = vadd.f32 %v443, 1.0
  %v504 = vadd.f32 %v445, 1.0
  %v505 = vadd.f32 %v447, 1.0
  %v506 = vadd.f32 %v449, 1.0
  %v507 = vadd.f32 %v451, 1.0
  %v508 = vadd.f32 %v453, 1.0
  %v509 = vadd.f32 %v455, 1.0
  %v510 = vadd.f32 %v457, 1.0
  %v511 = vadd.f32 %v459, 1.0
  %v512 = vadd.f32 %v461, 1.0
  %v513 = vadd.f32 %v463, 1.0
  %v514 = vadd.f32 %v465, 1.0
  %v515 = vadd.f32 %v467, 1.0
  %v516 = vadd.f32 %v469, 1.0
  %v517 = vadd.f32 %v471, 1.0
  %v518 = vadd.f32 %v473, 1.0
  %v519 = vadd.f32 %v475, 1.0
  %v520 = vadd.f32 %v477, 1.0
  %v521 = vadd.f32 %v479, 1.0
  %v522 = vadd.f32 %v481, 1.0
  %v523 = vadd.f32 %v483, 1.0
  %v524 = vadd.f32 %v485, 1.0
  %v525 = vadd.f32 %v487, 1.0
  %v526 = vadd.f32 %v489, 1.0
  %v527 = vadd.f32 %v491, 1.0
  %v528 = vadd.f32 %v493, 1.0
  %v529 = vadd.f32 %v495, 1.0
  %v530 = vadd.f32 %v497, 1.0
  %v531 = vadd.f32 %v499, 1.0
  %v532 = vrcp.pop %v500
  %v533 = vmul.f32 1.0, %v532
  %v534 = vrcp.pop %v501
  %v535 = vmul.f32 1.0, %v534
  %v536 = vrcp.pop %v502
  %v537 = vmul.f32 1.0, %v536
  %v538 = vrcp.pop %v503
  %v539 = vmul.f32 1.0, %v538
  %v540 = vrcp.pop %v504
  %v541 = vmul.f32 1.0, %v540
  %v542 = vrcp.pop %v505
  %v543 = vmul.f32 1.0, %v542
  %v544 = vrcp.pop %v506
  %v545 = vmul.f32 1.0, %v544
  %v546 = vrcp.pop %v507
  %v547 = vmul.f32 1.0, %v546
  %v548 = vrcp.pop %v508
  %v549 = vmul.f32 1.0, %v548
  %v550 = vrcp.pop %v509
  %v551 = vmul.f32 1.0, %v550
  %v552 = vrcp.pop %v510
  %v553 = vmul.f32 1.0, %v552
  %v554 = vrcp.pop %v511
  %v555 = vmul.f32 1.0, %v554
  %v556 = vrcp.pop %v512
  %v557 = vmul.f32 1.0, %v556
  %v558 = vrcp.pop %v513
  %v559 = vmul.f32 1.0, %v558
  %v560 = vrcp.pop %v514
  %v561 = vmul.f32 1.0, %v560
  %v562 = vrcp.pop %v515
  %v563 = vmul.f32 1.0, %v562
  %v564 = vrcp.pop %v516
  %v565 = vmul.f32 1.0, %v564
  %v566 = vrcp.pop %v517
  %v567 = vmul.f32 1.0, %v566
  %v568 = vrcp.pop %v518
  %v569 = vmul.f32 1.0, %v568
  %v570 = vrcp.pop %v519
  %v571 = vmul.f32 1.0, %v570
  %v572 = vrcp.pop %v520
  %v573 = vmul.f32 1.0, %v572
  %v574 = vrcp.pop %v521
  %v575 = vmul.f32 1.0, %v574
  %v576 = vrcp.pop %v522
  %v577 = vmul.f32 1.0, %v576
  %v578 = vrcp.pop %v523
  %v579 = vmul.f32 1.0, %v578
  %v580 = vrcp.pop %v524
  %v581 = vmul.f32 1.0, %v580
  %v582 = vrcp.pop %v525
  %v583 = vmul.f32 1.0, %v582
  %v584 = vrcp.pop %v526
  %v585 = vmul.f32 1.0, %v584
  %v586 = vrcp.pop %v527
  %v587 = vmul.f32 1.0, %v586
  %v588 = vrcp.pop %v528
  %v589 = vmul.f32 1.0, %v588
  %v590 = vrcp.pop %v529
  %v591 = vmul.f32 1.0, %v590
  %v592 = vrcp.pop %v530
  %v593 = vmul.f32 1.0, %v592
  %v594 = vrcp.pop %v531
  %v595 = vmul.f32 1.0, %v594
  %v596 = vmul.f32 %v246, %v533
  %v597 = vmul.f32 %v251, %v535
  %v598 = vmul.f32 %v256, %v537
  %v599 = vmul.f32 %v261, %v539
  %v600 = vmul.f32 %v266, %v541
  %v601 = vmul.f32 %v271, %v543
  %v602 = vmul.f32 %v276, %v545
  %v603 = vmul.f32 %v281, %v547
  %v604 = vmul.f32 %v286, %v549
  %v605 = vmul.f32 %v291, %v551
  %v606 = vmul.f32 %v296, %v553
  %v607 = vmul.f32 %v301, %v555
  %v608 = vmul.f32 %v306, %v557
  %v609 = vmul.f32 %v311, %v559
  %v610 = vmul.f32 %v316, %v561
  %v611 = vmul.f32 %v321, %v563
  %v612 = vmul.f32 %v326, %v565
  %v613 = vmul.f32 %v331, %v567
  %v614 = vmul.f32 %v336, %v569
  %v615 = vmul.f32 %v341, %v571
  %v616 = vmul.f32 %v346, %v573
  %v617 = vmul.f32 %v351, %v575
  %v618 = vmul.f32 %v356, %v577
  %v619 = vmul.f32 %v361, %v579
  %v620 = vmul.f32 %v366, %v581
  %v621 = vmul.f32 %v371, %v583
  %v622 = vmul.f32 %v376, %v585
  %v623 = vmul.f32 %v381, %v587
  %v624 = vmul.f32 %v386, %v589
  %v625 = vmul.f32 %v391, %v591
  %v626 = vmul.f32 %v396, %v593
  %v627 = vmul.f32 %v401, %v595
  %v628 = vld [vmem:[%s3] sm:$0xff]
  %v629 = vld [vmem:[%s3 + $0x8] sm:$0xff]
  %v630 = vld [vmem:[%s3 + $0x10] sm:$0xf]
  %v631 = vld [vmem:[%s4] sm:$0x1]
  %v633 = vlaneseq
  %v634 = vshrl.u32 %v633, 7
  %v635 = vsub.s32 0, %v634
  %v636 = vrot.slane %v631, %v635
  %vm638 = vcmask 162816
  %v640 = vsel %vm638, %v596, 0
  %v643 = vsel %vm638, %v597, 0
  %v646 = vsel %vm638, %v598, 0
  %v649 = vsel %vm638, %v599, 0
  %v652 = vsel %vm638, %v600, 0
  %v655 = vsel %vm638, %v601, 0
  %v658 = vsel %vm638, %v602, 0
  %v661 = vsel %vm638, %v603, 0
  %v664 = vsel %vm638, %v604, 0
  %v667 = vsel %vm638, %v605, 0
  %v670 = vsel %vm638, %v606, 0
  %v673 = vsel %vm638, %v607, 0
  %v676 = vsel %vm638, %v608, 0
  %v679 = vsel %vm638, %v609, 0
  %v682 = vsel %vm638, %v610, 0
  %v685 = vsel %vm638, %v611, 0
  %v688 = vsel %vm638, %v612, 0
  %v691 = vsel %vm638, %v613, 0
  %v694 = vsel %vm638, %v614, 0
  %v697 = vsel %vm638, %v615, 0
  %v700 = vsel %vm638, %v616, 0
  %v703 = vsel %vm638, %v617, 0
  %v706 = vsel %vm638, %v618, 0
  %v709 = vsel %vm638, %v619, 0
  %v712 = vsel %vm638, %v620, 0
  %v715 = vsel %vm638, %v621, 0
  %v718 = vsel %vm638, %v622, 0
  %v721 = vsel %vm638, %v623, 0
  %v724 = vsel %vm638, %v624, 0
  %v727 = vsel %vm638, %v625, 0
  %v730 = vsel %vm638, %v626, 0
  %v733 = vsel %vm638, %v627, 0
  %vm735 = vcmask 1043456
  %v737 = vsel %vm735, %v630, 0
  %739 = vmatprep.subr.mxu0 0.0
  %740 = vmatpush1.msra.mxu0 %v628
  %741 = vmatprep.subr.mxu0 0.0
  %742 = vmatpush1.msra.mxu0 %v629
  %743 = vmatprep.subr.mxu0 0.0
  %744 = vmatpush1.msra.mxu0 %v737
  %745 = vmatprep.subr.mxu0 0.0
  %746 = vmatpush1.msra.mxu0 0.0
  %747 = vmatprep.subr.mxu0 0.0
  %748 = vmatpush1.msra.mxu0 0.0
  %749 = vmatprep.subr.mxu0 0.0
  %750 = vmatpush1.msra.mxu0 0.0
  %751 = vmatprep.subr.mxu0 0.0
  %752 = vmatpush1.msra.mxu0 0.0
  %753 = vmatprep.subr.mxu0 0.0
  %754 = vmatpush1.msra.mxu0 0.0
  %755 = vmatprep.subr.mxu0 0.0
  %756 = vmatpush1.msra.mxu0 0.0
  %757 = vmatprep.subr.mxu0 0.0
  %758 = vmatpush1.msra.mxu0 0.0
  %759 = vmatprep.subr.mxu0 0.0
  %760 = vmatpush1.msra.mxu0 0.0
  %761 = vmatprep.subr.mxu0 0.0
  %762 = vmatpush1.msra.mxu0 0.0
  %763 = vmatprep.subr.mxu0 0.0
  %764 = vmatpush1.msra.mxu0 0.0
  %765 = vmatprep.subr.mxu0 0.0
  %766 = vmatpush1.msra.mxu0 0.0
  %767 = vmatprep.subr.mxu0 0.0
  %768 = vmatpush1.msra.mxu0 0.0
  %769 = vmatprep.subr.mxu0 0.0
  %770 = vmatpush1.msra.mxu0 0.0
  %771 = vmatprep.subr.mxu0 0.0
  %772 = vmatpush1.msra.mxu0 0.0
  %773 = vmatprep.subr.mxu0 0.0
  %774 = vmatpush1.msra.mxu0 0.0
  %775 = vmatprep.subr.mxu0 0.0
  %776 = vmatpush1.msra.mxu0 0.0
  %777 = vmatprep.subr.mxu0 0.0
  %778 = vmatpush1.msra.mxu0 0.0
  %779 = vmatprep.subr.mxu0 0.0
  %780 = vmatpush1.msra.mxu0 0.0
  %781 = vmatprep.subr.mxu0 0.0
  %782 = vmatpush1.msra.mxu0 0.0
  %783 = vmatprep.subr.mxu0 0.0
  %784 = vmatpush1.msra.mxu0 0.0
  %785 = vmatprep.subr.mxu0 0.0
  %786 = vmatpush1.msra.mxu0 0.0
  %787 = vmatprep.subr.mxu0 0.0
  %788 = vmatpush1.msra.mxu0 0.0
  %789 = vmatprep.subr.mxu0 0.0
  %790 = vmatpush1.msra.mxu0 0.0
  %791 = vmatprep.subr.mxu0 0.0
  %792 = vmatpush1.msra.mxu0 0.0
  %793 = vmatprep.subr.mxu0 0.0
  %794 = vmatpush1.msra.mxu0 0.0
  %795 = vmatprep.subr.mxu0 0.0
  %796 = vmatpush1.msra.mxu0 0.0
  %797 = vmatprep.subr.mxu0 0.0
  %798 = vmatpush1.msra.mxu0 0.0
  %799 = vmatprep.subr.mxu0 0.0
  %800 = vmatpush1.msra.mxu0 0.0
  %801 = vmatprep.subr.mxu0 0.0
  %802 = vmatpush1.msra.mxu0 0.0
  %803 = vmatprep.mubr.f32.mxu0 0.0
  %804 = vmatmul.mubr.f32.gmra.mrb[0].mxu0 %v640
  %v805 = vpop.f32.mrb[0].mxu0
  %v806 = vadd.f32 %v636, %v805
  %v807 = vpop.f32.mrb[0].mxu0
  %808 = vmatprep.mubr.f32.mxu0 0.0
  %809 = vmatmul.mubr.f32.gmra.mrb[0].mxu0 %v643
  %v810 = vpop.f32.mrb[0].mxu0
  %v811 = vadd.f32 %v636, %v810
  %v812 = vpop.f32.mrb[0].mxu0
  %813 = vmatprep.mubr.f32.mxu0 0.0
  %814 = vmatmul.mubr.f32.gmra.mrb[0].mxu0 %v646
  %v815 = vpop.f32.mrb[0].mxu0
  %v816 = vadd.f32 %v636, %v815
  %v817 = vpop.f32.mrb[0].mxu0
  %818 = vmatprep.mubr.f32.mxu0 0.0
  %819 = vmatmul.mubr.f32.gmra.mrb[0].mxu0 %v649
  %v820 = vpop.f32.mrb[0].mxu0
  %v821 = vadd.f32 %v636, %v820
  %v822 = vpop.f32.mrb[0].mxu0
  %823 = vmatprep.mubr.f32.mxu0 0.0
  %824 = vmatmul.mubr.f32.gmra.mrb[0].mxu0 %v652
  %v825 = vpop.f32.mrb[0].mxu0
  %v826 = vadd.f32 %v636, %v825
  %v827 = vpop.f32.mrb[0].mxu0
  %828 = vmatprep.mubr.f32.mxu0 0.0
  %829 = vmatmul.mubr.f32.gmra.mrb[0].mxu0 %v655
  %v830 = vpop.f32.mrb[0].mxu0
  %v831 = vadd.f32 %v636, %v830
  %v832 = vpop.f32.mrb[0].mxu0
  %833 = vmatprep.mubr.f32.mxu0 0.0
  %834 = vmatmul.mubr.f32.gmra.mrb[0].mxu0 %v658
  %v835 = vpop.f32.mrb[0].mxu0
  %v836 = vadd.f32 %v636, %v835
  %v837 = vpop.f32.mrb[0].mxu0
  %838 = vmatprep.mubr.f32.mxu0 0.0
  %839 = vmatmul.mubr.f32.gmra.mrb[0].mxu0 %v661
  %v840 = vpop.f32.mrb[0].mxu0
  %v841 = vadd.f32 %v636, %v840
  %v842 = vpop.f32.mrb[0].mxu0
  %843 = vmatprep.mubr.f32.mxu0 0.0
  %844 = vmatmul.mubr.f32.gmra.mrb[0].mxu0 %v664
  %v845 = vpop.f32.mrb[0].mxu0
  %v846 = vadd.f32 %v636, %v845
  %v847 = vpop.f32.mrb[0].mxu0
  %848 = vmatprep.mubr.f32.mxu0 0.0
  %849 = vmatmul.mubr.f32.gmra.mrb[0].mxu0 %v667
  %v850 = vpop.f32.mrb[0].mxu0
  %v851 = vadd.f32 %v636, %v850
  %v852 = vpop.f32.mrb[0].mxu0
  %853 = vmatprep.mubr.f32.mxu0 0.0
  %854 = vmatmul.mubr.f32.gmra.mrb[0].mxu0 %v670
  %v855 = vpop.f32.mrb[0].mxu0
  %v856 = vadd.f32 %v636, %v855
  %v857 = vpop.f32.mrb[0].mxu0
  %858 = vmatprep.mubr.f32.mxu0 0.0
  %859 = vmatmul.mubr.f32.gmra.mrb[0].mxu0 %v673
  %v860 = vpop.f32.mrb[0].mxu0
  %v861 = vadd.f32 %v636, %v860
  %v862 = vpop.f32.mrb[0].mxu0
  %863 = vmatprep.mubr.f32.mxu0 0.0
  %864 = vmatmul.mubr.f32.gmra.mrb[0].mxu0 %v676
  %v865 = vpop.f32.mrb[0].mxu0
  %v866 = vadd.f32 %v636, %v865
  %v867 = vpop.f32.mrb[0].mxu0
  %868 = vmatprep.mubr.f32.mxu0 0.0
  %869 = vmatmul.mubr.f32.gmra.mrb[0].mxu0 %v679
  %v870 = vpop.f32.mrb[0].mxu0
  %v871 = vadd.f32 %v636, %v870
  %v872 = vpop.f32.mrb[0].mxu0
  %873 = vmatprep.mubr.f32.mxu0 0.0
  %874 = vmatmul.mubr.f32.gmra.mrb[0].mxu0 %v682
  %v875 = vpop.f32.mrb[0].mxu0
  %v876 = vadd.f32 %v636, %v875
  %v877 = vpop.f32.mrb[0].mxu0
  %878 = vmatprep.mubr.f32.mxu0 0.0
  %879 = vmatmul.mubr.f32.gmra.mrb[0].mxu0 %v685
  %v880 = vpop.f32.mrb[0].mxu0
  %v881 = vadd.f32 %v636, %v880
  %v882 = vpop.f32.mrb[0].mxu0
  %883 = vmatprep.mubr.f32.mxu0 0.0
  %884 = vmatmul.mubr.f32.gmra.mrb[0].mxu0 %v688
  %v885 = vpop.f32.mrb[0].mxu0
  %v886 = vadd.f32 %v636, %v885
  %v887 = vpop.f32.mrb[0].mxu0
  %888 = vmatprep.mubr.f32.mxu0 0.0
  %889 = vmatmul.mubr.f32.gmra.mrb[0].mxu0 %v691
  %v890 = vpop.f32.mrb[0].mxu0
  %v891 = vadd.f32 %v636, %v890
  %v892 = vpop.f32.mrb[0].mxu0
  %893 = vmatprep.mubr.f32.mxu0 0.0
  %894 = vmatmul.mubr.f32.gmra.mrb[0].mxu0 %v694
  %v895 = vpop.f32.mrb[0].mxu0
  %v896 = vadd.f32 %v636, %v895
  %v897 = vpop.f32.mrb[0].mxu0
  %898 = vmatprep.mubr.f32.mxu0 0.0
  %899 = vmatmul.mubr.f32.gmra.mrb[0].mxu0 %v697
  %v900 = vpop.f32.mrb[0].mxu0
  %v901 = vadd.f32 %v636, %v900
  %v902 = vpop.f32.mrb[0].mxu0
  %903 = vmatprep.mubr.f32.mxu0 0.0
  %904 = vmatmul.mubr.f32.gmra.mrb[0].mxu0 %v700
  %v905 = vpop.f32.mrb[0].mxu0
  %v906 = vadd.f32 %v636, %v905
  %v907 = vpop.f32.mrb[0].mxu0
  %908 = vmatprep.mubr.f32.mxu0 0.0
  %909 = vmatmul.mubr.f32.gmra.mrb[0].mxu0 %v703
  %v910 = vpop.f32.mrb[0].mxu0
  %v911 = vadd.f32 %v636, %v910
  %v912 = vpop.f32.mrb[0].mxu0
  %913 = vmatprep.mubr.f32.mxu0 0.0
  %914 = vmatmul.mubr.f32.gmra.mrb[0].mxu0 %v706
  %v915 = vpop.f32.mrb[0].mxu0
  %v916 = vadd.f32 %v636, %v915
  %v917 = vpop.f32.mrb[0].mxu0
  %918 = vmatprep.mubr.f32.mxu0 0.0
  %919 = vmatmul.mubr.f32.gmra.mrb[0].mxu0 %v709
  %v920 = vpop.f32.mrb[0].mxu0
  %v921 = vadd.f32 %v636, %v920
  %v922 = vpop.f32.mrb[0].mxu0
  %923 = vmatprep.mubr.f32.mxu0 0.0
  %924 = vmatmul.mubr.f32.gmra.mrb[0].mxu0 %v712
  %v925 = vpop.f32.mrb[0].mxu0
  %v926 = vadd.f32 %v636, %v925
  %v927 = vpop.f32.mrb[0].mxu0
  %928 = vmatprep.mubr.f32.mxu0 0.0
  %929 = vmatmul.mubr.f32.gmra.mrb[0].mxu0 %v715
  %v930 = vpop.f32.mrb[0].mxu0
  %v931 = vadd.f32 %v636, %v930
  %v932 = vpop.f32.mrb[0].mxu0
  %933 = vmatprep.mubr.f32.mxu0 0.0
  %934 = vmatmul.mubr.f32.gmra.mrb[0].mxu0 %v718
  %v935 = vpop.f32.mrb[0].mxu0
  %v936 = vadd.f32 %v636, %v935
  %v937 = vpop.f32.mrb[0].mxu0
  %938 = vmatprep.mubr.f32.mxu0 0.0
  %939 = vmatmul.mubr.f32.gmra.mrb[0].mxu0 %v721
  %v940 = vpop.f32.mrb[0].mxu0
  %v941 = vadd.f32 %v636, %v940
  %v942 = vpop.f32.mrb[0].mxu0
  %943 = vmatprep.mubr.f32.mxu0 0.0
  %944 = vmatmul.mubr.f32.gmra.mrb[0].mxu0 %v724
  %v945 = vpop.f32.mrb[0].mxu0
  %v946 = vadd.f32 %v636, %v945
  %v947 = vpop.f32.mrb[0].mxu0
  %948 = vmatprep.mubr.f32.mxu0 0.0
  %949 = vmatmul.mubr.f32.gmra.mrb[0].mxu0 %v727
  %v950 = vpop.f32.mrb[0].mxu0
  %v951 = vadd.f32 %v636, %v950
  %v952 = vpop.f32.mrb[0].mxu0
  %953 = vmatprep.mubr.f32.mxu0 0.0
  %954 = vmatmul.mubr.f32.gmra.mrb[0].mxu0 %v730
  %v955 = vpop.f32.mrb[0].mxu0
  %v956 = vadd.f32 %v636, %v955
  %v957 = vpop.f32.mrb[0].mxu0
  %958 = vmatprep.mubr.f32.mxu0 0.0
  %959 = vmatmul.mubr.f32.gmra.mrb[0].mxu0 %v733
  %v960 = vpop.f32.mrb[0].mxu0
  %v961 = vadd.f32 %v636, %v960
  %v962 = vpop.f32.mrb[0].mxu0
  %963 = vdwg.mxu0
  %v964 = vxor.u32 %v806, 2147483648
  %v965 = vxor.u32 %v811, 2147483648
  %v966 = vxor.u32 %v816, 2147483648
  %v967 = vxor.u32 %v821, 2147483648
  %v968 = vxor.u32 %v826, 2147483648
  %v969 = vxor.u32 %v831, 2147483648
  %v970 = vxor.u32 %v836, 2147483648
  %v971 = vxor.u32 %v841, 2147483648
  %v972 = vxor.u32 %v846, 2147483648
  %v973 = vxor.u32 %v851, 2147483648
  %v974 = vxor.u32 %v856, 2147483648
  %v975 = vxor.u32 %v861, 2147483648
  %v976 = vxor.u32 %v866, 2147483648
  %v977 = vxor.u32 %v871, 2147483648
  %v978 = vxor.u32 %v876, 2147483648
  %v979 = vxor.u32 %v881, 2147483648
  %v980 = vxor.u32 %v886, 2147483648
  %v981 = vxor.u32 %v891, 2147483648
  %v982 = vxor.u32 %v896, 2147483648
  %v983 = vxor.u32 %v901, 2147483648
  %v984 = vxor.u32 %v906, 2147483648
  %v985 = vxor.u32 %v911, 2147483648
  %v986 = vxor.u32 %v916, 2147483648
  %v987 = vxor.u32 %v921, 2147483648
  %v988 = vxor.u32 %v926, 2147483648
  %v989 = vxor.u32 %v931, 2147483648
  %v990 = vxor.u32 %v936, 2147483648
  %v991 = vxor.u32 %v941, 2147483648
  %v992 = vxor.u32 %v946, 2147483648
  %v993 = vxor.u32 %v951, 2147483648
  %v994 = vxor.u32 %v956, 2147483648
  %v995 = vxor.u32 %v961, 2147483648
  %v996 = vmul.f32 %v964, 1.442695
  %v997 = vpow.pop %v996
  %v998 = vmul.f32 %v965, 1.442695
  %v999 = vpow.pop %v998
  %v1000 = vmul.f32 %v966, 1.442695
  %v1001 = vpow.pop %v1000
  %v1002 = vmul.f32 %v967, 1.442695
  %v1003 = vpow.pop %v1002
  %v1004 = vmul.f32 %v968, 1.442695
  %v1005 = vpow.pop %v1004
  %v1006 = vmul.f32 %v969, 1.442695
  %v1007 = vpow.pop %v1006
  %v1008 = vmul.f32 %v970, 1.442695
  %v1009 = vpow.pop %v1008
  %v1010 = vmul.f32 %v971, 1.442695
  %v1011 = vpow.pop %v1010
  %v1012 = vmul.f32 %v972, 1.442695
  %v1013 = vpow.pop %v1012
  %v1014 = vmul.f32 %v973, 1.442695
  %v1015 = vpow.pop %v1014
  %v1016 = vmul.f32 %v974, 1.442695
  %v1017 = vpow.pop %v1016
  %v1018 = vmul.f32 %v975, 1.442695
  %v1019 = vpow.pop %v1018
  %v1020 = vmul.f32 %v976, 1.442695
  %v1021 = vpow.pop %v1020
  %v1022 = vmul.f32 %v977, 1.442695
  %v1023 = vpow.pop %v1022
  %v1024 = vmul.f32 %v978, 1.442695
  %v1025 = vpow.pop %v1024
  %v1026 = vmul.f32 %v979, 1.442695
  %v1027 = vpow.pop %v1026
  %v1028 = vmul.f32 %v980, 1.442695
  %v1029 = vpow.pop %v1028
  %v1030 = vmul.f32 %v981, 1.442695
  %v1031 = vpow.pop %v1030
  %v1032 = vmul.f32 %v982, 1.442695
  %v1033 = vpow.pop %v1032
  %v1034 = vmul.f32 %v983, 1.442695
  %v1035 = vpow.pop %v1034
  %v1036 = vmul.f32 %v984, 1.442695
  %v1037 = vpow.pop %v1036
  %v1038 = vmul.f32 %v985, 1.442695
  %v1039 = vpow.pop %v1038
  %v1040 = vmul.f32 %v986, 1.442695
  %v1041 = vpow.pop %v1040
  %v1042 = vmul.f32 %v987, 1.442695
  %v1043 = vpow.pop %v1042
  %v1044 = vmul.f32 %v988, 1.442695
  %v1045 = vpow.pop %v1044
  %v1046 = vmul.f32 %v989, 1.442695
  %v1047 = vpow.pop %v1046
  %v1048 = vmul.f32 %v990, 1.442695
  %v1049 = vpow.pop %v1048
  %v1050 = vmul.f32 %v991, 1.442695
  %v1051 = vpow.pop %v1050
  %v1052 = vmul.f32 %v992, 1.442695
  %v1053 = vpow.pop %v1052
  %v1054 = vmul.f32 %v993, 1.442695
  %v1055 = vpow.pop %v1054
  %v1056 = vmul.f32 %v994, 1.442695
  %v1057 = vpow.pop %v1056
  %v1058 = vmul.f32 %v995, 1.442695
  %v1059 = vpow.pop %v1058
  %v1060 = vadd.f32 %v997, 1.0
  %v1061 = vadd.f32 %v999, 1.0
  %v1062 = vadd.f32 %v1001, 1.0
  %v1063 = vadd.f32 %v1003, 1.0
  %v1064 = vadd.f32 %v1005, 1.0
  %v1065 = vadd.f32 %v1007, 1.0
  %v1066 = vadd.f32 %v1009, 1.0
  %v1067 = vadd.f32 %v1011, 1.0
  %v1068 = vadd.f32 %v1013, 1.0
  %v1069 = vadd.f32 %v1015, 1.0
  %v1070 = vadd.f32 %v1017, 1.0
  %v1071 = vadd.f32 %v1019, 1.0
  %v1072 = vadd.f32 %v1021, 1.0
  %v1073 = vadd.f32 %v1023, 1.0
  %v1074 = vadd.f32 %v1025, 1.0
  %v1075 = vadd.f32 %v1027, 1.0
  %v1076 = vadd.f32 %v1029, 1.0
  %v1077 = vadd.f32 %v1031, 1.0
  %v1078 = vadd.f32 %v1033, 1.0
  %v1079 = vadd.f32 %v1035, 1.0
  %v1080 = vadd.f32 %v1037, 1.0
  %v1081 = vadd.f32 %v1039, 1.0
  %v1082 = vadd.f32 %v1041, 1.0
  %v1083 = vadd.f32 %v1043, 1.0
  %v1084 = vadd.f32 %v1045, 1.0
  %v1085 = vadd.f32 %v1047, 1.0
  %v1086 = vadd.f32 %v1049, 1.0
  %v1087 = vadd.f32 %v1051, 1.0
  %v1088 = vadd.f32 %v1053, 1.0
  %v1089 = vadd.f32 %v1055, 1.0
  %v1090 = vadd.f32 %v1057, 1.0
  %v1091 = vadd.f32 %v1059, 1.0
  %v1092 = vrcp.pop %v1060
  %v1093 = vmul.f32 1.0, %v1092
  %v1094 = vrcp.pop %v1061
  %v1095 = vmul.f32 1.0, %v1094
  %v1096 = vrcp.pop %v1062
  %v1097 = vmul.f32 1.0, %v1096
  %v1098 = vrcp.pop %v1063
  %v1099 = vmul.f32 1.0, %v1098
  %v1100 = vrcp.pop %v1064
  %v1101 = vmul.f32 1.0, %v1100
  %v1102 = vrcp.pop %v1065
  %v1103 = vmul.f32 1.0, %v1102
  %v1104 = vrcp.pop %v1066
  %v1105 = vmul.f32 1.0, %v1104
  %v1106 = vrcp.pop %v1067
  %v1107 = vmul.f32 1.0, %v1106
  %v1108 = vrcp.pop %v1068
  %v1109 = vmul.f32 1.0, %v1108
  %v1110 = vrcp.pop %v1069
  %v1111 = vmul.f32 1.0, %v1110
  %v1112 = vrcp.pop %v1070
  %v1113 = vmul.f32 1.0, %v1112
  %v1114 = vrcp.pop %v1071
  %v1115 = vmul.f32 1.0, %v1114
  %v1116 = vrcp.pop %v1072
  %v1117 = vmul.f32 1.0, %v1116
  %v1118 = vrcp.pop %v1073
  %v1119 = vmul.f32 1.0, %v1118
  %v1120 = vrcp.pop %v1074
  %v1121 = vmul.f32 1.0, %v1120
  %v1122 = vrcp.pop %v1075
  %v1123 = vmul.f32 1.0, %v1122
  %v1124 = vrcp.pop %v1076
  %v1125 = vmul.f32 1.0, %v1124
  %v1126 = vrcp.pop %v1077
  %v1127 = vmul.f32 1.0, %v1126
  %v1128 = vrcp.pop %v1078
  %v1129 = vmul.f32 1.0, %v1128
  %v1130 = vrcp.pop %v1079
  %v1131 = vmul.f32 1.0, %v1130
  %v1132 = vrcp.pop %v1080
  %v1133 = vmul.f32 1.0, %v1132
  %v1134 = vrcp.pop %v1081
  %v1135 = vmul.f32 1.0, %v1134
  %v1136 = vrcp.pop %v1082
  %v1137 = vmul.f32 1.0, %v1136
  %v1138 = vrcp.pop %v1083
  %v1139 = vmul.f32 1.0, %v1138
  %v1140 = vrcp.pop %v1084
  %v1141 = vmul.f32 1.0, %v1140
  %v1142 = vrcp.pop %v1085
  %v1143 = vmul.f32 1.0, %v1142
  %v1144 = vrcp.pop %v1086
  %v1145 = vmul.f32 1.0, %v1144
  %v1146 = vrcp.pop %v1087
  %v1147 = vmul.f32 1.0, %v1146
  %v1148 = vrcp.pop %v1088
  %v1149 = vmul.f32 1.0, %v1148
  %v1150 = vrcp.pop %v1089
  %v1151 = vmul.f32 1.0, %v1150
  %v1152 = vrcp.pop %v1090
  %v1153 = vmul.f32 1.0, %v1152
  %v1154 = vrcp.pop %v1091
  %v1155 = vmul.f32 1.0, %v1154
  %v1156 = vmul.f32 %v806, %v1093
  %v1157 = vmul.f32 %v811, %v1095
  %v1158 = vmul.f32 %v816, %v1097
  %v1159 = vmul.f32 %v821, %v1099
  %v1160 = vmul.f32 %v826, %v1101
  %v1161 = vmul.f32 %v831, %v1103
  %v1162 = vmul.f32 %v836, %v1105
  %v1163 = vmul.f32 %v841, %v1107
  %v1164 = vmul.f32 %v846, %v1109
  %v1165 = vmul.f32 %v851, %v1111
  %v1166 = vmul.f32 %v856, %v1113
  %v1167 = vmul.f32 %v861, %v1115
  %v1168 = vmul.f32 %v866, %v1117
  %v1169 = vmul.f32 %v871, %v1119
  %v1170 = vmul.f32 %v876, %v1121
  %v1171 = vmul.f32 %v881, %v1123
  %v1172 = vmul.f32 %v886, %v1125
  %v1173 = vmul.f32 %v891, %v1127
  %v1174 = vmul.f32 %v896, %v1129
  %v1175 = vmul.f32 %v901, %v1131
  %v1176 = vmul.f32 %v906, %v1133
  %v1177 = vmul.f32 %v911, %v1135
  %v1178 = vmul.f32 %v916, %v1137
  %v1179 = vmul.f32 %v921, %v1139
  %v1180 = vmul.f32 %v926, %v1141
  %v1181 = vmul.f32 %v931, %v1143
  %v1182 = vmul.f32 %v936, %v1145
  %v1183 = vmul.f32 %v941, %v1147
  %v1184 = vmul.f32 %v946, %v1149
  %v1185 = vmul.f32 %v951, %v1151
  %v1186 = vmul.f32 %v956, %v1153
  %v1187 = vmul.f32 %v961, %v1155
  %v1188 = vld [vmem:[%s5] sm:$0x1f]
  %v1189 = vld [vmem:[#allocation2] sm:$0x1]
  %v1191 = vlaneseq
  %v1192 = vshrl.u32 %v1191, 7
  %v1193 = vsub.s32 0, %v1192
  %v1194 = vrot.slane %v1189, %v1193
  %vm1196 = vcmask 39936
  %v1198 = vsel %vm1196, %v1156, 0
  %v1201 = vsel %vm1196, %v1157, 0
  %v1204 = vsel %vm1196, %v1158, 0
  %v1207 = vsel %vm1196, %v1159, 0
  %v1210 = vsel %vm1196, %v1160, 0
  %v1213 = vsel %vm1196, %v1161, 0
  %v1216 = vsel %vm1196, %v1162, 0
  %v1219 = vsel %vm1196, %v1163, 0
  %v1222 = vsel %vm1196, %v1164, 0
  %v1225 = vsel %vm1196, %v1165, 0
  %v1228 = vsel %vm1196, %v1166, 0
  %v1231 = vsel %vm1196, %v1167, 0
  %v1234 = vsel %vm1196, %v1168, 0
  %v1237 = vsel %vm1196, %v1169, 0
  %v1240 = vsel %vm1196, %v1170, 0
  %v1243 = vsel %vm1196, %v1171, 0
  %v1246 = vsel %vm1196, %v1172, 0
  %v1249 = vsel %vm1196, %v1173, 0
  %v1252 = vsel %vm1196, %v1174, 0
  %v1255 = vsel %vm1196, %v1175, 0
  %v1258 = vsel %vm1196, %v1176, 0
  %v1261 = vsel %vm1196, %v1177, 0
  %v1264 = vsel %vm1196, %v1178, 0
  %v1267 = vsel %vm1196, %v1179, 0
  %v1270 = vsel %vm1196, %v1180, 0
  %v1273 = vsel %vm1196, %v1181, 0
  %v1276 = vsel %vm1196, %v1182, 0
  %v1279 = vsel %vm1196, %v1183, 0
  %v1282 = vsel %vm1196, %v1184, 0
  %v1285 = vsel %vm1196, %v1185, 0
  %v1288 = vsel %vm1196, %v1186, 0
  %v1291 = vsel %vm1196, %v1187, 0
  %vm1293 = vcmask 1044480
  %v1295 = vsel %vm1293, %v1188, 0
  %1297 = vmatprep.subr.mxu0 0.0
  %1298 = vmatpush1.msra.mxu0 %v1295
  %1299 = vmatprep.subr.mxu0 0.0
  %1300 = vmatpush1.msra.mxu0 0.0
  %1301 = vmatprep.subr.mxu0 0.0
  %1302 = vmatpush1.msra.mxu0 0.0
  %1303 = vmatprep.subr.mxu0 0.0
  %1304 = vmatpush1.msra.mxu0 0.0
  %1305 = vmatprep.subr.mxu0 0.0
  %1306 = vmatpush1.msra.mxu0 0.0
  %1307 = vmatprep.subr.mxu0 0.0
  %1308 = vmatpush1.msra.mxu0 0.0
  %1309 = vmatprep.subr.mxu0 0.0
  %1310 = vmatpush1.msra.mxu0 0.0
  %1311 = vmatprep.subr.mxu0 0.0
  %1312 = vmatpush1.msra.mxu0 0.0
  %1313 = vmatprep.subr.mxu0 0.0
  %1314 = vmatpush1.msra.mxu0 0.0
  %1315 = vmatprep.subr.mxu0 0.0
  %1316 = vmatpush1.msra.mxu0 0.0
  %1317 = vmatprep.subr.mxu0 0.0
  %1318 = vmatpush1.msra.mxu0 0.0
  %1319 = vmatprep.subr.mxu0 0.0
  %1320 = vmatpush1.msra.mxu0 0.0
  %1321 = vmatprep.subr.mxu0 0.0
  %1322 = vmatpush1.msra.mxu0 0.0
  %1323 = vmatprep.subr.mxu0 0.0
  %1324 = vmatpush1.msra.mxu0 0.0
  %1325 = vmatprep.subr.mxu0 0.0
  %1326 = vmatpush1.msra.mxu0 0.0
  %1327 = vmatprep.subr.mxu0 0.0
  %1328 = vmatpush1.msra.mxu0 0.0
  %1329 = vmatprep.subr.mxu0 0.0
  %1330 = vmatpush1.msra.mxu0 0.0
  %1331 = vmatprep.subr.mxu0 0.0
  %1332 = vmatpush1.msra.mxu0 0.0
  %1333 = vmatprep.subr.mxu0 0.0
  %1334 = vmatpush1.msra.mxu0 0.0
  %1335 = vmatprep.subr.mxu0 0.0
  %1336 = vmatpush1.msra.mxu0 0.0
  %1337 = vmatprep.subr.mxu0 0.0
  %1338 = vmatpush1.msra.mxu0 0.0
  %1339 = vmatprep.subr.mxu0 0.0
  %1340 = vmatpush1.msra.mxu0 0.0
  %1341 = vmatprep.subr.mxu0 0.0
  %1342 = vmatpush1.msra.mxu0 0.0
  %1343 = vmatprep.subr.mxu0 0.0
  %1344 = vmatpush1.msra.mxu0 0.0
  %1345 = vmatprep.subr.mxu0 0.0
  %1346 = vmatpush1.msra.mxu0 0.0
  %1347 = vmatprep.subr.mxu0 0.0
  %1348 = vmatpush1.msra.mxu0 0.0
  %1349 = vmatprep.subr.mxu0 0.0
  %1350 = vmatpush1.msra.mxu0 0.0
  %1351 = vmatprep.subr.mxu0 0.0
  %1352 = vmatpush1.msra.mxu0 0.0
  %1353 = vmatprep.subr.mxu0 0.0
  %1354 = vmatpush1.msra.mxu0 0.0
  %1355 = vmatprep.subr.mxu0 0.0
  %1356 = vmatpush1.msra.mxu0 0.0
  %1357 = vmatprep.subr.mxu0 0.0
  %1358 = vmatpush1.msra.mxu0 0.0
  %1359 = vmatprep.subr.mxu0 0.0
  %1360 = vmatpush1.msra.mxu0 0.0
  %1361 = vmatprep.mubr.f32.mxu0 0.0
  %1362 = vmatmul.mubr.f32.gmra.mrb[0].mxu0 %v1198
  %v1363 = vpop.f32.mrb[0].mxu0
  %v1364 = vadd.f32 %v1194, %v1363
  %v1365 = vpop.f32.mrb[0].mxu0
  %1366 = vmatprep.mubr.f32.mxu0 0.0
  %1367 = vmatmul.mubr.f32.gmra.mrb[0].mxu0 %v1201
  %v1368 = vpop.f32.mrb[0].mxu0
  %v1369 = vadd.f32 %v1194, %v1368
  %v1370 = vpop.f32.mrb[0].mxu0
  %1371 = vmatprep.mubr.f32.mxu0 0.0
  %1372 = vmatmul.mubr.f32.gmra.mrb[0].mxu0 %v1204
  %v1373 = vpop.f32.mrb[0].mxu0
  %v1374 = vadd.f32 %v1194, %v1373
  %v1375 = vpop.f32.mrb[0].mxu0
  %1376 = vmatprep.mubr.f32.mxu0 0.0
  %1377 = vmatmul.mubr.f32.gmra.mrb[0].mxu0 %v1207
  %v1378 = vpop.f32.mrb[0].mxu0
  %v1379 = vadd.f32 %v1194, %v1378
  %v1380 = vpop.f32.mrb[0].mxu0
  %1381 = vmatprep.mubr.f32.mxu0 0.0
  %1382 = vmatmul.mubr.f32.gmra.mrb[0].mxu0 %v1210
  %v1383 = vpop.f32.mrb[0].mxu0
  %v1384 = vadd.f32 %v1194, %v1383
  %v1385 = vpop.f32.mrb[0].mxu0
  %1386 = vmatprep.mubr.f32.mxu0 0.0
  %1387 = vmatmul.mubr.f32.gmra.mrb[0].mxu0 %v1213
  %v1388 = vpop.f32.mrb[0].mxu0
  %v1389 = vadd.f32 %v1194, %v1388
  %v1390 = vpop.f32.mrb[0].mxu0
  %1391 = vmatprep.mubr.f32.mxu0 0.0
  %1392 = vmatmul.mubr.f32.gmra.mrb[0].mxu0 %v1216
  %v1393 = vpop.f32.mrb[0].mxu0
  %v1394 = vadd.f32 %v1194, %v1393
  %v1395 = vpop.f32.mrb[0].mxu0
  %1396 = vmatprep.mubr.f32.mxu0 0.0
  %1397 = vmatmul.mubr.f32.gmra.mrb[0].mxu0 %v1219
  %v1398 = vpop.f32.mrb[0].mxu0
  %v1399 = vadd.f32 %v1194, %v1398
  %v1400 = vpop.f32.mrb[0].mxu0
  %1401 = vmatprep.mubr.f32.mxu0 0.0
  %1402 = vmatmul.mubr.f32.gmra.mrb[0].mxu0 %v1222
  %v1403 = vpop.f32.mrb[0].mxu0
  %v1404 = vadd.f32 %v1194, %v1403
  %v1405 = vpop.f32.mrb[0].mxu0
  %1406 = vmatprep.mubr.f32.mxu0 0.0
  %1407 = vmatmul.mubr.f32.gmra.mrb[0].mxu0 %v1225
  %v1408 = vpop.f32.mrb[0].mxu0
  %v1409 = vadd.f32 %v1194, %v1408
  %v1410 = vpop.f32.mrb[0].mxu0
  %1411 = vmatprep.mubr.f32.mxu0 0.0
  %1412 = vmatmul.mubr.f32.gmra.mrb[0].mxu0 %v1228
  %v1413 = vpop.f32.mrb[0].mxu0
  %v1414 = vadd.f32 %v1194, %v1413
  %v1415 = vpop.f32.mrb[0].mxu0
  %1416 = vmatprep.mubr.f32.mxu0 0.0
  %1417 = vmatmul.mubr.f32.gmra.mrb[0].mxu0 %v1231
  %v1418 = vpop.f32.mrb[0].mxu0
  %v1419 = vadd.f32 %v1194, %v1418
  %v1420 = vpop.f32.mrb[0].mxu0
  %1421 = vmatprep.mubr.f32.mxu0 0.0
  %1422 = vmatmul.mubr.f32.gmra.mrb[0].mxu0 %v1234
  %v1423 = vpop.f32.mrb[0].mxu0
  %v1424 = vadd.f32 %v1194, %v1423
  %v1425 = vpop.f32.mrb[0].mxu0
  %1426 = vmatprep.mubr.f32.mxu0 0.0
  %1427 = vmatmul.mubr.f32.gmra.mrb[0].mxu0 %v1237
  %v1428 = vpop.f32.mrb[0].mxu0
  %v1429 = vadd.f32 %v1194, %v1428
  %v1430 = vpop.f32.mrb[0].mxu0
  %1431 = vmatprep.mubr.f32.mxu0 0.0
  %1432 = vmatmul.mubr.f32.gmra.mrb[0].mxu0 %v1240
  %v1433 = vpop.f32.mrb[0].mxu0
  %v1434 = vadd.f32 %v1194, %v1433
  %v1435 = vpop.f32.mrb[0].mxu0
  %1436 = vmatprep.mubr.f32.mxu0 0.0
  %1437 = vmatmul.mubr.f32.gmra.mrb[0].mxu0 %v1243
  %v1438 = vpop.f32.mrb[0].mxu0
  %v1439 = vadd.f32 %v1194, %v1438
  %v1440 = vpop.f32.mrb[0].mxu0
  %1441 = vmatprep.mubr.f32.mxu0 0.0
  %1442 = vmatmul.mubr.f32.gmra.mrb[0].mxu0 %v1246
  %v1443 = vpop.f32.mrb[0].mxu0
  %v1444 = vadd.f32 %v1194, %v1443
  %v1445 = vpop.f32.mrb[0].mxu0
  %1446 = vmatprep.mubr.f32.mxu0 0.0
  %1447 = vmatmul.mubr.f32.gmra.mrb[0].mxu0 %v1249
  %v1448 = vpop.f32.mrb[0].mxu0
  %v1449 = vadd.f32 %v1194, %v1448
  %v1450 = vpop.f32.mrb[0].mxu0
  %1451 = vmatprep.mubr.f32.mxu0 0.0
  %1452 = vmatmul.mubr.f32.gmra.mrb[0].mxu0 %v1252
  %v1453 = vpop.f32.mrb[0].mxu0
  %v1454 = vadd.f32 %v1194, %v1453
  %v1455 = vpop.f32.mrb[0].mxu0
  %1456 = vmatprep.mubr.f32.mxu0 0.0
  %1457 = vmatmul.mubr.f32.gmra.mrb[0].mxu0 %v1255
  %v1458 = vpop.f32.mrb[0].mxu0
  %v1459 = vadd.f32 %v1194, %v1458
  %v1460 = vpop.f32.mrb[0].mxu0
  %1461 = vmatprep.mubr.f32.mxu0 0.0
  %1462 = vmatmul.mubr.f32.gmra.mrb[0].mxu0 %v1258
  %v1463 = vpop.f32.mrb[0].mxu0
  %v1464 = vadd.f32 %v1194, %v1463
  %v1465 = vpop.f32.mrb[0].mxu0
  %1466 = vmatprep.mubr.f32.mxu0 0.0
  %1467 = vmatmul.mubr.f32.gmra.mrb[0].mxu0 %v1261
  %v1468 = vpop.f32.mrb[0].mxu0
  %v1469 = vadd.f32 %v1194, %v1468
  %v1470 = vpop.f32.mrb[0].mxu0
  %1471 = vmatprep.mubr.f32.mxu0 0.0
  %1472 = vmatmul.mubr.f32.gmra.mrb[0].mxu0 %v1264
  %v1473 = vpop.f32.mrb[0].mxu0
  %v1474 = vadd.f32 %v1194, %v1473
  %v1475 = vpop.f32.mrb[0].mxu0
  %1476 = vmatprep.mubr.f32.mxu0 0.0
  %1477 = vmatmul.mubr.f32.gmra.mrb[0].mxu0 %v1267
  %v1478 = vpop.f32.mrb[0].mxu0
  %v1479 = vadd.f32 %v1194, %v1478
  %v1480 = vpop.f32.mrb[0].mxu0
  %1481 = vmatprep.mubr.f32.mxu0 0.0
  %1482 = vmatmul.mubr.f32.gmra.mrb[0].mxu0 %v1270
  %v1483 = vpop.f32.mrb[0].mxu0
  %v1484 = vadd.f32 %v1194, %v1483
  %v1485 = vpop.f32.mrb[0].mxu0
  %1486 = vmatprep.mubr.f32.mxu0 0.0
  %1487 = vmatmul.mubr.f32.gmra.mrb[0].mxu0 %v1273
  %v1488 = vpop.f32.mrb[0].mxu0
  %v1489 = vadd.f32 %v1194, %v1488
  %v1490 = vpop.f32.mrb[0].mxu0
  %1491 = vmatprep.mubr.f32.mxu0 0.0
  %1492 = vmatmul.mubr.f32.gmra.mrb[0].mxu0 %v1276
  %v1493 = vpop.f32.mrb[0].mxu0
  %v1494 = vadd.f32 %v1194, %v1493
  %v1495 = vpop.f32.mrb[0].mxu0
  %1496 = vmatprep.mubr.f32.mxu0 0.0
  %1497 = vmatmul.mubr.f32.gmra.mrb[0].mxu0 %v1279
  %v1498 = vpop.f32.mrb[0].mxu0
  %v1499 = vadd.f32 %v1194, %v1498
  %v1500 = vpop.f32.mrb[0].mxu0
  %1501 = vmatprep.mubr.f32.mxu0 0.0
  %1502 = vmatmul.mubr.f32.gmra.mrb[0].mxu0 %v1282
  %v1503 = vpop.f32.mrb[0].mxu0
  %v1504 = vadd.f32 %v1194, %v1503
  %v1505 = vpop.f32.mrb[0].mxu0
  %1506 = vmatprep.mubr.f32.mxu0 0.0
  %1507 = vmatmul.mubr.f32.gmra.mrb[0].mxu0 %v1285
  %v1508 = vpop.f32.mrb[0].mxu0
  %v1509 = vadd.f32 %v1194, %v1508
  %v1510 = vpop.f32.mrb[0].mxu0
  %1511 = vmatprep.mubr.f32.mxu0 0.0
  %1512 = vmatmul.mubr.f32.gmra.mrb[0].mxu0 %v1288
  %v1513 = vpop.f32.mrb[0].mxu0
  %v1514 = vadd.f32 %v1194, %v1513
  %v1515 = vpop.f32.mrb[0].mxu0
  %1516 = vmatprep.mubr.f32.mxu0 0.0
  %1517 = vmatmul.mubr.f32.gmra.mrb[0].mxu0 %v1291
  %v1518 = vpop.f32.mrb[0].mxu0
  %v1519 = vadd.f32 %v1194, %v1518
  %v1520 = vpop.f32.mrb[0].mxu0
  %1521 = vdwg.mxu0
  %1522 = vrot.lane.b32.xlu0 %v1156, 20
  %v1523 = vpop.permute.xlu0 %1522
  %1524 = vrot.lane.b32.xlu0 %v1157, 20
  %v1525 = vpop.permute.xlu0 %1524
  %1526 = vrot.lane.b32.xlu0 %v1158, 20
  %v1527 = vpop.permute.xlu0 %1526
  %1528 = vrot.lane.b32.xlu0 %v1159, 20
  %v1529 = vpop.permute.xlu0 %1528
  %1530 = vrot.lane.b32.xlu0 %v1160, 20
  %v1531 = vpop.permute.xlu0 %1530
  %1532 = vrot.lane.b32.xlu0 %v1161, 20
  %v1533 = vpop.permute.xlu0 %1532
  %1534 = vrot.lane.b32.xlu0 %v1162, 20
  %v1535 = vpop.permute.xlu0 %1534
  %1536 = vrot.lane.b32.xlu0 %v1163, 20
  %v1537 = vpop.permute.xlu0 %1536
  %1538 = vrot.lane.b32.xlu0 %v1164, 20
  %v1539 = vpop.permute.xlu0 %1538
  %1540 = vrot.lane.b32.xlu0 %v1165, 20
  %v1541 = vpop.permute.xlu0 %1540
  %1542 = vrot.lane.b32.xlu0 %v1166, 20
  %v1543 = vpop.permute.xlu0 %1542
  %1544 = vrot.lane.b32.xlu0 %v1167, 20
  %v1545 = vpop.permute.xlu0 %1544
  %1546 = vrot.lane.b32.xlu0 %v1168, 20
  %v1547 = vpop.permute.xlu0 %1546
  %1548 = vrot.lane.b32.xlu0 %v1169, 20
  %v1549 = vpop.permute.xlu0 %1548
  %1550 = vrot.lane.b32.xlu0 %v1170, 20
  %v1551 = vpop.permute.xlu0 %1550
  %1552 = vrot.lane.b32.xlu0 %v1171, 20
  %v1553 = vpop.permute.xlu0 %1552
  %1554 = vrot.lane.b32.xlu0 %v1172, 20
  %v1555 = vpop.permute.xlu0 %1554
  %1556 = vrot.lane.b32.xlu0 %v1173, 20
  %v1557 = vpop.permute.xlu0 %1556
  %1558 = vrot.lane.b32.xlu0 %v1174, 20
  %v1559 = vpop.permute.xlu0 %1558
  %1560 = vrot.lane.b32.xlu0 %v1175, 20
  %v1561 = vpop.permute.xlu0 %1560
  %1562 = vrot.lane.b32.xlu0 %v1176, 20
  %v1563 = vpop.permute.xlu0 %1562
  %1564 = vrot.lane.b32.xlu0 %v1177, 20
  %v1565 = vpop.permute.xlu0 %1564
  %1566 = vrot.lane.b32.xlu0 %v1178, 20
  %v1567 = vpop.permute.xlu0 %1566
  %1568 = vrot.lane.b32.xlu0 %v1179, 20
  %v1569 = vpop.permute.xlu0 %1568
  %1570 = vrot.lane.b32.xlu0 %v1180, 20
  %v1571 = vpop.permute.xlu0 %1570
  %1572 = vrot.lane.b32.xlu0 %v1181, 20
  %v1573 = vpop.permute.xlu0 %1572
  %1574 = vrot.lane.b32.xlu0 %v1182, 20
  %v1575 = vpop.permute.xlu0 %1574
  %1576 = vrot.lane.b32.xlu0 %v1183, 20
  %v1577 = vpop.permute.xlu0 %1576
  %1578 = vrot.lane.b32.xlu0 %v1184, 20
  %v1579 = vpop.permute.xlu0 %1578
  %1580 = vrot.lane.b32.xlu0 %v1185, 20
  %v1581 = vpop.permute.xlu0 %1580
  %1582 = vrot.lane.b32.xlu0 %v1186, 20
  %v1583 = vpop.permute.xlu0 %1582
  %1584 = vrot.lane.b32.xlu0 %v1187, 20
  %v1585 = vpop.permute.xlu0 %1584
  %1650 = vrot.lane.b32.xlu0 %v1364, 25
  %v1651 = vpop.permute.xlu0 %1650
  %1652 = vrot.lane.b32.xlu0 %v1369, 25
  %v1653 = vpop.permute.xlu0 %1652
  %1654 = vrot.lane.b32.xlu0 %v1374, 25
  %v1655 = vpop.permute.xlu0 %1654
  %1656 = vrot.lane.b32.xlu0 %v1379, 25
  %v1657 = vpop.permute.xlu0 %1656
  %1658 = vrot.lane.b32.xlu0 %v1384, 25
  %v1659 = vpop.permute.xlu0 %1658
  %1660 = vrot.lane.b32.xlu0 %v1389, 25
  %v1661 = vpop.permute.xlu0 %1660
  %1662 = vrot.lane.b32.xlu0 %v1394, 25
  %v1663 = vpop.permute.xlu0 %1662
  %1664 = vrot.lane.b32.xlu0 %v1399, 25
  %v1665 = vpop.permute.xlu0 %1664
  %1666 = vrot.lane.b32.xlu0 %v1404, 25
  %v1667 = vpop.permute.xlu0 %1666
  %1668 = vrot.lane.b32.xlu0 %v1409, 25
  %v1669 = vpop.permute.xlu0 %1668
  %1670 = vrot.lane.b32.xlu0 %v1414, 25
  %v1671 = vpop.permute.xlu0 %1670
  %1672 = vrot.lane.b32.xlu0 %v1419, 25
  %v1673 = vpop.permute.xlu0 %1672
  %1674 = vrot.lane.b32.xlu0 %v1424, 25
  %v1675 = vpop.permute.xlu0 %1674
  %1676 = vrot.lane.b32.xlu0 %v1429, 25
  %v1677 = vpop.permute.xlu0 %1676
  %1678 = vrot.lane.b32.xlu0 %v1434, 25
  %v1679 = vpop.permute.xlu0 %1678
  %1680 = vrot.lane.b32.xlu0 %v1439, 25
  %v1681 = vpop.permute.xlu0 %1680
  %1682 = vrot.lane.b32.xlu0 %v1444, 25
  %v1683 = vpop.permute.xlu0 %1682
  %1684 = vrot.lane.b32.xlu0 %v1449, 25
  %v1685 = vpop.permute.xlu0 %1684
  %1686 = vrot.lane.b32.xlu0 %v1454, 25
  %v1687 = vpop.permute.xlu0 %1686
  %1688 = vrot.lane.b32.xlu0 %v1459, 25
  %v1689 = vpop.permute.xlu0 %1688
  %1690 = vrot.lane.b32.xlu0 %v1464, 25
  %v1691 = vpop.permute.xlu0 %1690
  %1692 = vrot.lane.b32.xlu0 %v1469, 25
  %v1693 = vpop.permute.xlu0 %1692
  %1694 = vrot.lane.b32.xlu0 %v1474, 25
  %v1695 = vpop.permute.xlu0 %1694
  %1696 = vrot.lane.b32.xlu0 %v1479, 25
  %v1697 = vpop.permute.xlu0 %1696
  %1698 = vrot.lane.b32.xlu0 %v1484, 25
  %v1699 = vpop.permute.xlu0 %1698
  %1700 = vrot.lane.b32.xlu0 %v1489, 25
  %v1701 = vpop.permute.xlu0 %1700
  %1702 = vrot.lane.b32.xlu0 %v1494, 25
  %v1703 = vpop.permute.xlu0 %1702
  %1704 = vrot.lane.b32.xlu0 %v1499, 25
  %v1705 = vpop.permute.xlu0 %1704
  %1706 = vrot.lane.b32.xlu0 %v1504, 25
  %v1707 = vpop.permute.xlu0 %1706
  %1708 = vrot.lane.b32.xlu0 %v1509, 25
  %v1709 = vpop.permute.xlu0 %1708
  %1710 = vrot.lane.b32.xlu0 %v1514, 25
  %v1711 = vpop.permute.xlu0 %1710
  %1712 = vrot.lane.b32.xlu0 %v1519, 25
  %v1713 = vpop.permute.xlu0 %1712
  %v1746 = vsel %vm638, %v596, %v1523
  %v1747 = vsel %vm638, %v597, %v1525
  %v1748 = vsel %vm638, %v598, %v1527
  %v1749 = vsel %vm638, %v599, %v1529
  %v1750 = vsel %vm638, %v600, %v1531
  %v1751 = vsel %vm638, %v601, %v1533
  %v1752 = vsel %vm638, %v602, %v1535
  %v1753 = vsel %vm638, %v603, %v1537
  %v1754 = vsel %vm638, %v604, %v1539
  %v1755 = vsel %vm638, %v605, %v1541
  %v1756 = vsel %vm638, %v606, %v1543
  %v1757 = vsel %vm638, %v607, %v1545
  %v1758 = vsel %vm638, %v608, %v1547
  %v1759 = vsel %vm638, %v609, %v1549
  %v1760 = vsel %vm638, %v610, %v1551
  %v1761 = vsel %vm638, %v611, %v1553
  %v1762 = vsel %vm638, %v612, %v1555
  %v1763 = vsel %vm638, %v613, %v1557
  %v1764 = vsel %vm638, %v614, %v1559
  %v1765 = vsel %vm638, %v615, %v1561
  %v1766 = vsel %vm638, %v616, %v1563
  %v1767 = vsel %vm638, %v617, %v1565
  %v1768 = vsel %vm638, %v618, %v1567
  %v1769 = vsel %vm638, %v619, %v1569
  %v1770 = vsel %vm638, %v620, %v1571
  %v1771 = vsel %vm638, %v621, %v1573
  %v1772 = vsel %vm638, %v622, %v1575
  %v1773 = vsel %vm638, %v623, %v1577
  %v1774 = vsel %vm638, %v624, %v1579
  %v1775 = vsel %vm638, %v625, %v1581
  %v1776 = vsel %vm638, %v626, %v1583
  %v1777 = vsel %vm638, %v627, %v1585
  %vm1778 = vcmask 203776
  %v1779 = vsel %vm1778, %v1746, %v1651
  %v1780 = vsel %vm1778, %v1747, %v1653
  %v1781 = vsel %vm1778, %v1748, %v1655
  %v1782 = vsel %vm1778, %v1749, %v1657
  %v1783 = vsel %vm1778, %v1750, %v1659
  %v1784 = vsel %vm1778, %v1751, %v1661
  %v1785 = vsel %vm1778, %v1752, %v1663
  %v1786 = vsel %vm1778, %v1753, %v1665
  %v1787 = vsel %vm1778, %v1754, %v1667
  %v1788 = vsel %vm1778, %v1755, %v1669
  %v1789 = vsel %vm1778, %v1756, %v1671
  %v1790 = vsel %vm1778, %v1757, %v1673
  %v1791 = vsel %vm1778, %v1758, %v1675
  %v1792 = vsel %vm1778, %v1759, %v1677
  %v1793 = vsel %vm1778, %v1760, %v1679
  %v1794 = vsel %vm1778, %v1761, %v1681
  %v1795 = vsel %vm1778, %v1762, %v1683
  %v1796 = vsel %vm1778, %v1763, %v1685
  %v1797 = vsel %vm1778, %v1764, %v1687
  %v1798 = vsel %vm1778, %v1765, %v1689
  %v1799 = vsel %vm1778, %v1766, %v1691
  %v1800 = vsel %vm1778, %v1767, %v1693
  %v1801 = vsel %vm1778, %v1768, %v1695
  %v1802 = vsel %vm1778, %v1769, %v1697
  %v1803 = vsel %vm1778, %v1770, %v1699
  %v1804 = vsel %vm1778, %v1771, %v1701
  %v1805 = vsel %vm1778, %v1772, %v1703
  %v1806 = vsel %vm1778, %v1773, %v1705
  %v1807 = vsel %vm1778, %v1774, %v1707
  %v1808 = vsel %vm1778, %v1775, %v1709
  %v1809 = vsel %vm1778, %v1776, %v1711
  %v1810 = vsel %vm1778, %v1777, %v1713
  %vm1811 = vcmask 211968
  %1812 = vst.msk [vmem:[%s7] sm:$0xff] %vm1811, %v1779
  %1813 = vst.msk [vmem:[%s7 + $0x8] sm:$0xff] %vm1811, %v1780
  %1814 = vst.msk [vmem:[%s7 + $0x10] sm:$0xff] %vm1811, %v1781
  %1815 = vst.msk [vmem:[%s7 + $0x18] sm:$0xff] %vm1811, %v1782
  %1816 = vst.msk [vmem:[%s7 + $0x20] sm:$0xff] %vm1811, %v1783
  %1817 = vst.msk [vmem:[%s7 + $0x28] sm:$0xff] %vm1811, %v1784
  %1818 = vst.msk [vmem:[%s7 + $0x30] sm:$0xff] %vm1811, %v1785
  %1819 = vst.msk [vmem:[%s7 + $0x38] sm:$0xff] %vm1811, %v1786
  %1820 = vst.msk [vmem:[%s7 + $0x40] sm:$0xff] %vm1811, %v1787
  %1821 = vst.msk [vmem:[%s7 + $0x48] sm:$0xff] %vm1811, %v1788
  %1822 = vst.msk [vmem:[%s7 + $0x50] sm:$0xff] %vm1811, %v1789
  %1823 = vst.msk [vmem:[%s7 + $0x58] sm:$0xff] %vm1811, %v1790
  %1824 = vst.msk [vmem:[%s7 + $0x60] sm:$0xff] %vm1811, %v1791
  %1825 = vst.msk [vmem:[%s7 + $0x68] sm:$0xff] %vm1811, %v1792
  %1826 = vst.msk [vmem:[%s7 + $0x70] sm:$0xff] %vm1811, %v1793
  %1827 = vst.msk [vmem:[%s7 + $0x78] sm:$0xff] %vm1811, %v1794
  %1828 = vst.msk [vmem:[%s7 + $0x80] sm:$0xff] %vm1811, %v1795
  %1829 = vst.msk [vmem:[%s7 + $0x88] sm:$0xff] %vm1811, %v1796
  %1830 = vst.msk [vmem:[%s7 + $0x90] sm:$0xff] %vm1811, %v1797
  %1831 = vst.msk [vmem:[%s7 + $0x98] sm:$0xff] %vm1811, %v1798
  %1832 = vst.msk [vmem:[%s7 + $0xa0] sm:$0xff] %vm1811, %v1799
  %1833 = vst.msk [vmem:[%s7 + $0xa8] sm:$0xff] %vm1811, %v1800
  %1834 = vst.msk [vmem:[%s7 + $0xb0] sm:$0xff] %vm1811, %v1801
  %1835 = vst.msk [vmem:[%s7 + $0xb8] sm:$0xff] %vm1811, %v1802
  %1836 = vst.msk [vmem:[%s7 + $0xc0] sm:$0xff] %vm1811, %v1803
  %1837 = vst.msk [vmem:[%s7 + $0xc8] sm:$0xff] %vm1811, %v1804
  %1838 = vst.msk [vmem:[%s7 + $0xd0] sm:$0xff] %vm1811, %v1805
  %1839 = vst.msk [vmem:[%s7 + $0xd8] sm:$0xff] %vm1811, %v1806
  %1840 = vst.msk [vmem:[%s7 + $0xe0] sm:$0xff] %vm1811, %v1807
  %1841 = vst.msk [vmem:[%s7 + $0xe8] sm:$0xff] %vm1811, %v1808
  %1842 = vst.msk [vmem:[%s7 + $0xf0] sm:$0xff] %vm1811, %v1809
  %1843 = vst.msk [vmem:[%s7 + $0xf8] sm:$0xff] %vm1811, %v1810
  // Predicated region
  $region30: #{tpu_custom_call.1} parent=0 // pred_check
    _
  $region31: #{tpu_custom_call.1} parent=0 // pred_check_branch
    %1845 = sbr.rel (0) target = $region33
  $region32: #{tpu_custom_call.1} parent=0 // pred_region
    _
  $region33: #{tpu_custom_call.1} parent=0 // pred_fallthru
    _
  // Predicated region
  $region34: #{tpu_custom_call.1} parent=0 // pred_check
    _
  $region35: #{tpu_custom_call.1} parent=0 // pred_check_branch
    %1847 = sbr.rel (0) target = $region37
  $region36: #{tpu_custom_call.1} parent=0 // pred_region
    _
  $region37: #{tpu_custom_call.1} parent=0 // pred_fallthru
    _

</llo_original>
